<compile_context>
chip_gen: v7x
topology: tpu7x:2x2x1
jax: 0.10.0
libtpu: 0.0.40
codegen_flags: <defaults>
</compile_context>

<pallas_src>
import functools

import numpy as np
import jax
import jax.numpy as jnp
from jax import lax
from jax.experimental import pallas as pl
from jax.experimental.pallas import tpu as pltpu

# ---- static problem configuration (synthetic discriminator `m`) -------------
NEG_SLOPE = 0.2
BATCH = 2
C_IN = 4
SPATIAL = 16
C1 = 8                      # conv1 out channels
C2 = 16                     # conv2 out channels
H1 = W1 = SPATIAL // 2      # 8  (after conv1, stride 2)
H2 = W2 = SPATIAL // 4      # 4  (after conv2, stride 2)
M1 = BATCH * H1 * W1        # 128 activation rows after conv1
M2 = BATCH * H2 * W2        # 32  activation rows after conv2
K1 = C_IN * 9               # 36  im2col K for conv1
LANES = 128                 # lane-dense padding target for channel / K dims


# ----------------------------------------------------------------------------
# Fused Pallas kernel: conv1 + LeakyReLU + conv2 + LeakyReLU + final linear
# ----------------------------------------------------------------------------
def _fused_disc_kernel(p1_ref, w1_ref, b1_ref, psel_ref, w2_ref, b2_ref,
                       w3t_ref, rsel_ref, b3_ref, out_ref):
    # --- conv1 as im2col matmul + bias + LeakyReLU (result stays on-chip) ---
    a1 = jnp.dot(p1_ref[...], w1_ref[...], preferred_element_type=jnp.float32)
    a1 = a1 + b1_ref[...]                                  # (M1, LANES)
    act1 = jnp.where(a1 >= 0.0, a1, NEG_SLOPE * a1)

    # --- conv2: per-tap row selection (MXU) + per-tap weight matmul ----------
    # out2[m2, :] = sum_t (P_t @ act1)[m2, :] @ W2_t   (zero rows of P_t == padding)
    acc2 = jnp.zeros((M2, LANES), jnp.float32)
    for t in range(9):                                     # unrolled 3x3 taps
        g = jnp.dot(psel_ref[t], act1, preferred_element_type=jnp.float32)
        acc2 = acc2 + jnp.dot(g, w2_ref[t], preferred_element_type=jnp.float32)
    acc2 = acc2 + b2_ref[...]
    act2 = jnp.where(acc2 >= 0.0, acc2, NEG_SLOPE * acc2)  # (M2, LANES)

    # --- final linear: w3 pre-permuted/tiled host-side to this (n*p, c) layout
    z = act2 * w3t_ref[...]                                # (M2, LANES) VPU
    rz = jnp.dot(rsel_ref[...], z,
                 preferred_element_type=jnp.float32)       # (BATCH, LANES)
    logits = jnp.sum(rz, axis=-1, keepdims=True) + b3_ref[0]   # (BATCH, 1)
    # lane-dense output block; sliced back to (BATCH, 1) outside the kernel.
    out_ref[...] = jnp.broadcast_to(logits, out_ref.shape).astype(out_ref.dtype)


# ----------------------------------------------------------------------------
# Host-side, one-time parameter packing (lane-dense, kernel-ready operands)
# ----------------------------------------------------------------------------
def make_params(key):
    k1, k2, k3, k4, k5, k6 = jax.random.split(key, 6)
    return {
        "w1": 0.1 * jax.random.normal(k1, (C1, C_IN, 3, 3), jnp.float32),
        "b1": 0.01 * jax.random.normal(k2, (C1,), jnp.float32),
        "w2": 0.1 * jax.random.normal(k3, (C2, C1, 3, 3), jnp.float32),
        "b2": 0.01 * jax.random.normal(k4, (C2,), jnp.float32),
        "w3": 0.1 * jax.random.normal(k5, (C2 * H2 * W2, 1), jnp.float32),
        "b3": 0.01 * jax.random.normal(k6, (1,), jnp.float32),
    }


def _build_psel():
    """0/1 selection matrices: psel[t] @ act1 gathers conv2's tap-t input rows."""
    psel = np.zeros((9, M2, M1), np.float32)
    for n in range(BATCH):
        for ho in range(H2):
            for wo in range(W2):
                m2 = n * H2 * W2 + ho * W2 + wo
                for ki in range(3):
                    for kj in range(3):
                        hi = 2 * ho + ki - 1
                        wi = 2 * wo + kj - 1
                        if 0 <= hi < H1 and 0 <= wi < W1:
                            m1 = n * H1 * W1 + hi * W1 + wi
                            psel[ki * 3 + kj, m2, m1] = 1.0
    return jnp.asarray(psel)


def _build_rsel():
    """Per-sample row-sum matrix: rsel @ (M2, .) sums the 16 positions of each sample."""
    rsel = np.zeros((BATCH, M2), np.float32)
    for n in range(BATCH):
        rsel[n, n * H2 * W2:(n + 1) * H2 * W2] = 1.0
    return jnp.asarray(rsel)


def prepare_fused(params):
    # conv1 weight: (C1, C_IN, 3, 3) -> (K1, C1), column order (cin, ki, kj) to
    # match the im2col patch columns; zero-pad K and Cout to 128 lanes.
    w1_2d = params["w1"].reshape(C1, K1).T
    w1p = jnp.zeros((LANES, LANES), jnp.float32).at[:K1, :C1].set(w1_2d)
    b1p = jnp.zeros((1, LANES), jnp.float32).at[0, :C1].set(params["b1"])

    # conv2 weight: (C2, C1, 3, 3) -> (9, C1, C2) with t = ki*3 + kj; pad to 128.
    w2r = jnp.transpose(params["w2"], (2, 3, 1, 0)).reshape(9, C1, C2)
    w2p = jnp.zeros((9, LANES, LANES), jnp.float32).at[:, :C1, :C2].set(w2r)
    b2p = jnp.zeros((1, LANES), jnp.float32).at[0, :C2].set(params["b2"])

    # final linear weight: PyTorch flatten order is (c, p); re-lay it out as
    # [(n*16 + p), c] so the kernel only needs an elementwise mul + reductions.
    P = H2 * W2
    w3m = params["w3"].reshape(C2, P)                      # [c, p]
    w3t = jnp.zeros((M2, LANES), jnp.float32).at[:, :C2].set(
        jnp.tile(w3m.T, (BATCH, 1)))                       # [(n, p), c]

    return {
        "w1p": w1p, "b1p": b1p,
        "psel": _build_psel(), "w2p": w2p, "b2p": b2p,
        "w3t": w3t, "rsel": _build_rsel(),
        "b3": params["b3"].reshape(1).astype(jnp.float32),
    }


# ----------------------------------------------------------------------------
# Wrapper-boundary glue + the fused pallas_call
# ----------------------------------------------------------------------------
def _im2col_conv1(x):
    """NCHW input -> (M1, K1) im2col patches for the 3x3 / stride 2 / pad 1 conv."""
    xp = jnp.pad(x, ((0, 0), (0, 0), (1, 1), (1, 1)))
    cols = []
    for ki in range(3):
        for kj in range(3):
            cols.append(xp[:, :, ki:ki + 2 * H1:2, kj:kj + 2 * W1:2])
    patches = jnp.stack(cols, axis=2)              # (N, C, 9, H1, W1)
    patches = patches.transpose(0, 3, 4, 1, 2)     # (N, H1, W1, C, 9)
    return patches.reshape(M1, K1)


@jax.jit
def discriminator_m(fused, x):
    # Input-boundary layout glue only (x is ~8 KB); everything after this is
    # one fused Pallas kernel with VMEM-resident intermediates.
    patches1 = _im2col_conv1(x.astype(jnp.float32))
    p1 = jnp.zeros((M1, LANES), jnp.float32).at[:, :K1].set(patches1)

    out_padded = pl.pallas_call(
        _fused_disc_kernel,
        out_shape=jax.ShapeDtypeStruct((BATCH, LANES), jnp.float32),
        grid=(1,),
        in_specs=[
            pl.BlockSpec((M1, LANES), lambda i: (0, 0)),           # conv1 patches
            pl.BlockSpec((LANES, LANES), lambda i: (0, 0)),        # w1 (padded)
            pl.BlockSpec((1, LANES), lambda i: (0, 0)),            # b1
            pl.BlockSpec((9, M2, M1), lambda i: (0, 0, 0)),        # conv2 tap selectors
            pl.BlockSpec((9, LANES, LANES), lambda i: (0, 0, 0)),  # w2 per tap (padded)
            pl.BlockSpec((1, LANES), lambda i: (0, 0)),            # b2
            pl.BlockSpec((M2, LANES), lambda i: (0, 0)),           # permuted/tiled w3
            pl.BlockSpec((BATCH, M2), lambda i: (0, 0)),           # per-sample reduce
            pl.BlockSpec(memory_space=pltpu.MemorySpace.SMEM),     # b3 scalar
        ],
        out_specs=pl.BlockSpec((BATCH, LANES), lambda i: (0, 0)),  # lane-dense out
        compiler_params=pltpu.CompilerParams(
            dimension_semantics=("arbitrary",)),
    )(p1, fused["w1p"], fused["b1p"], fused["psel"], fused["w2p"],
      fused["b2p"], fused["w3t"], fused["rsel"], fused["b3"])

    return out_padded[:, :1]                                       # (BATCH, 1)


def grad_disc_wrapper_forward(fused, x):
    # GradDiscWrapper.forward(x) == self.m(x): pure delegation, no extra compute.
    return discriminator_m(fused, x)


# ----------------------------------------------------------------------------
# Pure-JAX reference of the synthetic discriminator (for correctness check)
# ----------------------------------------------------------------------------
def _reference_m(params, x):
    def conv_lrelu(h, w, b):
        y = lax.conv_general_dilated(h, w, (2, 2), ((1, 1), (1, 1)),
                                     dimension_numbers=("NCHW", "OIHW", "NCHW"))
        y = y + b[None, :, None, None]
        return jnp.where(y >= 0, y, NEG_SLOPE * y)

    h = conv_lrelu(x, params["w1"], params["b1"])
    h = conv_lrelu(h, params["w2"], params["b2"])
    h = h.reshape(h.shape[0], -1)
    return h @ params["w3"] + params["b3"]


if __name__ == "__main__":
    key = jax.random.PRNGKey(0)
    kx, kp = jax.random.split(key)
    x = jax.random.normal(kx, (BATCH, C_IN, SPATIAL, SPATIAL), jnp.float32)
    params = make_params(kp)
    fused = prepare_fused(params)

    out = grad_disc_wrapper_forward(fused, x)
    out = jax.block_until_ready(out)
    assert out.shape == (BATCH, 1) and out.dtype == jnp.float32

    ref = jax.block_until_ready(_reference_m(params, x))
    assert jnp.allclose(out, ref, atol=5e-3, rtol=5e-3), (out, ref)

    print("KERNEL_OK")
</pallas_src>

<mosaic_0001>
module attributes {stable_mosaic.version = 11 : i64} {
  func.func @_fused_disc_kernel(%arg0: i32, %arg1: memref<128x128xf32, #tpu.memory_space<vmem>>, %arg2: memref<128x128xf32, #tpu.memory_space<vmem>>, %arg3: memref<1x128xf32, #tpu.memory_space<vmem>>, %arg4: memref<9x32x128xf32, #tpu.memory_space<vmem>>, %arg5: memref<9x128x128xf32, #tpu.memory_space<vmem>>, %arg6: memref<1x128xf32, #tpu.memory_space<vmem>>, %arg7: memref<32x128xf32, #tpu.memory_space<vmem>>, %arg8: memref<2x32xf32, #tpu.memory_space<vmem>>, %arg9: memref<1xf32, #tpu.memory_space<smem>>, %arg10: memref<2x128xf32, #tpu.memory_space<vmem>>) attributes {dimension_semantics = [#tpu.dimension_semantics<arbitrary>], iteration_bounds = array<i64: 1>, scalar_prefetch = 0 : i64, scratch_operands = 0 : i64, tpu.core_type = #tpu.core_type<tc>, window_params = [{pipeline_mode = #tpu.pipeline_mode<synchronous>, transform_indices = @transform_0, window_bounds = array<i64: 128, 128>}, {pipeline_mode = #tpu.pipeline_mode<synchronous>, transform_indices = @transform_1, window_bounds = array<i64: 128, 128>}, {pipeline_mode = #tpu.pipeline_mode<synchronous>, transform_indices = @transform_2, window_bounds = array<i64: 1, 128>}, {pipeline_mode = #tpu.pipeline_mode<synchronous>, transform_indices = @transform_3, window_bounds = array<i64: 9, 32, 128>}, {pipeline_mode = #tpu.pipeline_mode<synchronous>, transform_indices = @transform_4, window_bounds = array<i64: 9, 128, 128>}, {pipeline_mode = #tpu.pipeline_mode<synchronous>, transform_indices = @transform_5, window_bounds = array<i64: 1, 128>}, {pipeline_mode = #tpu.pipeline_mode<synchronous>, transform_indices = @transform_6, window_bounds = array<i64: 32, 128>}, {pipeline_mode = #tpu.pipeline_mode<synchronous>, transform_indices = @transform_7, window_bounds = array<i64: 2, 32>}, {transform_indices = @transform_8, window_bounds = array<i64: 1>}, {pipeline_mode = #tpu.pipeline_mode<synchronous>, transform_indices = @transform_9, window_bounds = array<i64: 2, 128>}]} {
    %c0 = arith.constant 0 : index
    %c0_0 = arith.constant 0 : index
    %0 = vector.load %arg1[%c0, %c0_0] : memref<128x128xf32, #tpu.memory_space<vmem>>, vector<128x128xf32>
    %c0_1 = arith.constant 0 : index
    %c0_2 = arith.constant 0 : index
    %1 = vector.load %arg2[%c0_1, %c0_2] : memref<128x128xf32, #tpu.memory_space<vmem>>, vector<128x128xf32>
    %cst = arith.constant dense<0.000000e+00> : vector<128x128xf32>
    %2 = tpu.matmul %0, %1, %cst {dimension_numbers = #tpu.dot_dimension_numbers<[1], [0], [0], [1], [0, 0, 1, 1], [], []>} : vector<128x128xf32>, vector<128x128xf32>, vector<128x128xf32> -> vector<128x128xf32>
    %c0_3 = arith.constant 0 : index
    %c0_4 = arith.constant 0 : index
    %3 = vector.load %arg3[%c0_3, %c0_4] : memref<1x128xf32, #tpu.memory_space<vmem>>, vector<1x128xf32>
    %4 = vector.broadcast %3 : vector<1x128xf32> to vector<128x128xf32>
    %5 = arith.addf %2, %4 : vector<128x128xf32>
    %cst_5 = arith.constant 0.000000e+00 : f32
    %6 = vector.broadcast %cst_5 : f32 to vector<128x128xf32>
    %7 = arith.cmpf oge, %5, %6 : vector<128x128xf32>
    %cst_6 = arith.constant 2.000000e-01 : f32
    %8 = vector.broadcast %cst_6 : f32 to vector<128x128xf32>
    %9 = arith.mulf %8, %5 : vector<128x128xf32>
    %10 = arith.select %7, %5, %9 : vector<128x128xi1>, vector<128x128xf32>
    %cst_7 = arith.constant 0.000000e+00 : f32
    %11 = vector.broadcast %cst_7 : f32 to vector<32x128xf32>
    %c0_8 = arith.constant 0 : index
    %c0_9 = arith.constant 0 : index
    %c0_10 = arith.constant 0 : index
    %12 = vector.load %arg4[%c0_8, %c0_9, %c0_10] : memref<9x32x128xf32, #tpu.memory_space<vmem>>, vector<1x32x128xf32>
    %13 = vector.shape_cast %12 : vector<1x32x128xf32> to vector<32x128xf32>
    %cst_11 = arith.constant dense<0.000000e+00> : vector<32x128xf32>
    %14 = tpu.matmul %13, %10, %cst_11 {dimension_numbers = #tpu.dot_dimension_numbers<[1], [0], [0], [1], [0, 0, 1, 1], [], []>} : vector<32x128xf32>, vector<128x128xf32>, vector<32x128xf32> -> vector<32x128xf32>
    %c0_12 = arith.constant 0 : index
    %c0_13 = arith.constant 0 : index
    %c0_14 = arith.constant 0 : index
    %15 = vector.load %arg5[%c0_12, %c0_13, %c0_14] : memref<9x128x128xf32, #tpu.memory_space<vmem>>, vector<1x128x128xf32>
    %16 = vector.shape_cast %15 : vector<1x128x128xf32> to vector<128x128xf32>
    %cst_15 = arith.constant dense<0.000000e+00> : vector<32x128xf32>
    %17 = tpu.matmul %14, %16, %cst_15 {dimension_numbers = #tpu.dot_dimension_numbers<[1], [0], [0], [1], [0, 0, 1, 1], [], []>} : vector<32x128xf32>, vector<128x128xf32>, vector<32x128xf32> -> vector<32x128xf32>
    %18 = arith.addf %11, %17 : vector<32x128xf32>
    %c1 = arith.constant 1 : index
    %c0_16 = arith.constant 0 : index
    %c0_17 = arith.constant 0 : index
    %19 = vector.load %arg4[%c1, %c0_16, %c0_17] : memref<9x32x128xf32, #tpu.memory_space<vmem>>, vector<1x32x128xf32>
    %20 = vector.shape_cast %19 : vector<1x32x128xf32> to vector<32x128xf32>
    %cst_18 = arith.constant dense<0.000000e+00> : vector<32x128xf32>
    %21 = tpu.matmul %20, %10, %cst_18 {dimension_numbers = #tpu.dot_dimension_numbers<[1], [0], [0], [1], [0, 0, 1, 1], [], []>} : vector<32x128xf32>, vector<128x128xf32>, vector<32x128xf32> -> vector<32x128xf32>
    %c1_19 = arith.constant 1 : index
    %c0_20 = arith.constant 0 : index
    %c0_21 = arith.constant 0 : index
    %22 = vector.load %arg5[%c1_19, %c0_20, %c0_21] : memref<9x128x128xf32, #tpu.memory_space<vmem>>, vector<1x128x128xf32>
    %23 = vector.shape_cast %22 : vector<1x128x128xf32> to vector<128x128xf32>
    %cst_22 = arith.constant dense<0.000000e+00> : vector<32x128xf32>
    %24 = tpu.matmul %21, %23, %cst_22 {dimension_numbers = #tpu.dot_dimension_numbers<[1], [0], [0], [1], [0, 0, 1, 1], [], []>} : vector<32x128xf32>, vector<128x128xf32>, vector<32x128xf32> -> vector<32x128xf32>
    %25 = arith.addf %18, %24 : vector<32x128xf32>
    %c2 = arith.constant 2 : index
    %c0_23 = arith.constant 0 : index
    %c0_24 = arith.constant 0 : index
    %26 = vector.load %arg4[%c2, %c0_23, %c0_24] : memref<9x32x128xf32, #tpu.memory_space<vmem>>, vector<1x32x128xf32>
    %27 = vector.shape_cast %26 : vector<1x32x128xf32> to vector<32x128xf32>
    %cst_25 = arith.constant dense<0.000000e+00> : vector<32x128xf32>
    %28 = tpu.matmul %27, %10, %cst_25 {dimension_numbers = #tpu.dot_dimension_numbers<[1], [0], [0], [1], [0, 0, 1, 1], [], []>} : vector<32x128xf32>, vector<128x128xf32>, vector<32x128xf32> -> vector<32x128xf32>
    %c2_26 = arith.constant 2 : index
    %c0_27 = arith.constant 0 : index
    %c0_28 = arith.constant 0 : index
    %29 = vector.load %arg5[%c2_26, %c0_27, %c0_28] : memref<9x128x128xf32, #tpu.memory_space<vmem>>, vector<1x128x128xf32>
    %30 = vector.shape_cast %29 : vector<1x128x128xf32> to vector<128x128xf32>
    %cst_29 = arith.constant dense<0.000000e+00> : vector<32x128xf32>
    %31 = tpu.matmul %28, %30, %cst_29 {dimension_numbers = #tpu.dot_dimension_numbers<[1], [0], [0], [1], [0, 0, 1, 1], [], []>} : vector<32x128xf32>, vector<128x128xf32>, vector<32x128xf32> -> vector<32x128xf32>
    %32 = arith.addf %25, %31 : vector<32x128xf32>
    %c3 = arith.constant 3 : index
    %c0_30 = arith.constant 0 : index
    %c0_31 = arith.constant 0 : index
    %33 = vector.load %arg4[%c3, %c0_30, %c0_31] : memref<9x32x128xf32, #tpu.memory_space<vmem>>, vector<1x32x128xf32>
    %34 = vector.shape_cast %33 : vector<1x32x128xf32> to vector<32x128xf32>
    %cst_32 = arith.constant dense<0.000000e+00> : vector<32x128xf32>
    %35 = tpu.matmul %34, %10, %cst_32 {dimension_numbers = #tpu.dot_dimension_numbers<[1], [0], [0], [1], [0, 0, 1, 1], [], []>} : vector<32x128xf32>, vector<128x128xf32>, vector<32x128xf32> -> vector<32x128xf32>
    %c3_33 = arith.constant 3 : index
    %c0_34 = arith.constant 0 : index
    %c0_35 = arith.constant 0 : index
    %36 = vector.load %arg5[%c3_33, %c0_34, %c0_35] : memref<9x128x128xf32, #tpu.memory_space<vmem>>, vector<1x128x128xf32>
    %37 = vector.shape_cast %36 : vector<1x128x128xf32> to vector<128x128xf32>
    %cst_36 = arith.constant dense<0.000000e+00> : vector<32x128xf32>
    %38 = tpu.matmul %35, %37, %cst_36 {dimension_numbers = #tpu.dot_dimension_numbers<[1], [0], [0], [1], [0, 0, 1, 1], [], []>} : vector<32x128xf32>, vector<128x128xf32>, vector<32x128xf32> -> vector<32x128xf32>
    %39 = arith.addf %32, %38 : vector<32x128xf32>
    %c4 = arith.constant 4 : index
    %c0_37 = arith.constant 0 : index
    %c0_38 = arith.constant 0 : index
    %40 = vector.load %arg4[%c4, %c0_37, %c0_38] : memref<9x32x128xf32, #tpu.memory_space<vmem>>, vector<1x32x128xf32>
    %41 = vector.shape_cast %40 : vector<1x32x128xf32> to vector<32x128xf32>
    %cst_39 = arith.constant dense<0.000000e+00> : vector<32x128xf32>
    %42 = tpu.matmul %41, %10, %cst_39 {dimension_numbers = #tpu.dot_dimension_numbers<[1], [0], [0], [1], [0, 0, 1, 1], [], []>} : vector<32x128xf32>, vector<128x128xf32>, vector<32x128xf32> -> vector<32x128xf32>
    %c4_40 = arith.constant 4 : index
    %c0_41 = arith.constant 0 : index
    %c0_42 = arith.constant 0 : index
    %43 = vector.load %arg5[%c4_40, %c0_41, %c0_42] : memref<9x128x128xf32, #tpu.memory_space<vmem>>, vector<1x128x128xf32>
    %44 = vector.shape_cast %43 : vector<1x128x128xf32> to vector<128x128xf32>
    %cst_43 = arith.constant dense<0.000000e+00> : vector<32x128xf32>
    %45 = tpu.matmul %42, %44, %cst_43 {dimension_numbers = #tpu.dot_dimension_numbers<[1], [0], [0], [1], [0, 0, 1, 1], [], []>} : vector<32x128xf32>, vector<128x128xf32>, vector<32x128xf32> -> vector<32x128xf32>
    %46 = arith.addf %39, %45 : vector<32x128xf32>
    %c5 = arith.constant 5 : index
    %c0_44 = arith.constant 0 : index
    %c0_45 = arith.constant 0 : index
    %47 = vector.load %arg4[%c5, %c0_44, %c0_45] : memref<9x32x128xf32, #tpu.memory_space<vmem>>, vector<1x32x128xf32>
    %48 = vector.shape_cast %47 : vector<1x32x128xf32> to vector<32x128xf32>
    %cst_46 = arith.constant dense<0.000000e+00> : vector<32x128xf32>
    %49 = tpu.matmul %48, %10, %cst_46 {dimension_numbers = #tpu.dot_dimension_numbers<[1], [0], [0], [1], [0, 0, 1, 1], [], []>} : vector<32x128xf32>, vector<128x128xf32>, vector<32x128xf32> -> vector<32x128xf32>
    %c5_47 = arith.constant 5 : index
    %c0_48 = arith.constant 0 : index
    %c0_49 = arith.constant 0 : index
    %50 = vector.load %arg5[%c5_47, %c0_48, %c0_49] : memref<9x128x128xf32, #tpu.memory_space<vmem>>, vector<1x128x128xf32>
    %51 = vector.shape_cast %50 : vector<1x128x128xf32> to vector<128x128xf32>
    %cst_50 = arith.constant dense<0.000000e+00> : vector<32x128xf32>
    %52 = tpu.matmul %49, %51, %cst_50 {dimension_numbers = #tpu.dot_dimension_numbers<[1], [0], [0], [1], [0, 0, 1, 1], [], []>} : vector<32x128xf32>, vector<128x128xf32>, vector<32x128xf32> -> vector<32x128xf32>
    %53 = arith.addf %46, %52 : vector<32x128xf32>
    %c6 = arith.constant 6 : index
    %c0_51 = arith.constant 0 : index
    %c0_52 = arith.constant 0 : index
    %54 = vector.load %arg4[%c6, %c0_51, %c0_52] : memref<9x32x128xf32, #tpu.memory_space<vmem>>, vector<1x32x128xf32>
    %55 = vector.shape_cast %54 : vector<1x32x128xf32> to vector<32x128xf32>
    %cst_53 = arith.constant dense<0.000000e+00> : vector<32x128xf32>
    %56 = tpu.matmul %55, %10, %cst_53 {dimension_numbers = #tpu.dot_dimension_numbers<[1], [0], [0], [1], [0, 0, 1, 1], [], []>} : vector<32x128xf32>, vector<128x128xf32>, vector<32x128xf32> -> vector<32x128xf32>
    %c6_54 = arith.constant 6 : index
    %c0_55 = arith.constant 0 : index
    %c0_56 = arith.constant 0 : index
    %57 = vector.load %arg5[%c6_54, %c0_55, %c0_56] : memref<9x128x128xf32, #tpu.memory_space<vmem>>, vector<1x128x128xf32>
    %58 = vector.shape_cast %57 : vector<1x128x128xf32> to vector<128x128xf32>
    %cst_57 = arith.constant dense<0.000000e+00> : vector<32x128xf32>
    %59 = tpu.matmul %56, %58, %cst_57 {dimension_numbers = #tpu.dot_dimension_numbers<[1], [0], [0], [1], [0, 0, 1, 1], [], []>} : vector<32x128xf32>, vector<128x128xf32>, vector<32x128xf32> -> vector<32x128xf32>
    %60 = arith.addf %53, %59 : vector<32x128xf32>
    %c7 = arith.constant 7 : index
    %c0_58 = arith.constant 0 : index
    %c0_59 = arith.constant 0 : index
    %61 = vector.load %arg4[%c7, %c0_58, %c0_59] : memref<9x32x128xf32, #tpu.memory_space<vmem>>, vector<1x32x128xf32>
    %62 = vector.shape_cast %61 : vector<1x32x128xf32> to vector<32x128xf32>
    %cst_60 = arith.constant dense<0.000000e+00> : vector<32x128xf32>
    %63 = tpu.matmul %62, %10, %cst_60 {dimension_numbers = #tpu.dot_dimension_numbers<[1], [0], [0], [1], [0, 0, 1, 1], [], []>} : vector<32x128xf32>, vector<128x128xf32>, vector<32x128xf32> -> vector<32x128xf32>
    %c7_61 = arith.constant 7 : index
    %c0_62 = arith.constant 0 : index
    %c0_63 = arith.constant 0 : index
    %64 = vector.load %arg5[%c7_61, %c0_62, %c0_63] : memref<9x128x128xf32, #tpu.memory_space<vmem>>, vector<1x128x128xf32>
    %65 = vector.shape_cast %64 : vector<1x128x128xf32> to vector<128x128xf32>
    %cst_64 = arith.constant dense<0.000000e+00> : vector<32x128xf32>
    %66 = tpu.matmul %63, %65, %cst_64 {dimension_numbers = #tpu.dot_dimension_numbers<[1], [0], [0], [1], [0, 0, 1, 1], [], []>} : vector<32x128xf32>, vector<128x128xf32>, vector<32x128xf32> -> vector<32x128xf32>
    %67 = arith.addf %60, %66 : vector<32x128xf32>
    %c8 = arith.constant 8 : index
    %c0_65 = arith.constant 0 : index
    %c0_66 = arith.constant 0 : index
    %68 = vector.load %arg4[%c8, %c0_65, %c0_66] : memref<9x32x128xf32, #tpu.memory_space<vmem>>, vector<1x32x128xf32>
    %69 = vector.shape_cast %68 : vector<1x32x128xf32> to vector<32x128xf32>
    %cst_67 = arith.constant dense<0.000000e+00> : vector<32x128xf32>
    %70 = tpu.matmul %69, %10, %cst_67 {dimension_numbers = #tpu.dot_dimension_numbers<[1], [0], [0], [1], [0, 0, 1, 1], [], []>} : vector<32x128xf32>, vector<128x128xf32>, vector<32x128xf32> -> vector<32x128xf32>
    %c8_68 = arith.constant 8 : index
    %c0_69 = arith.constant 0 : index
    %c0_70 = arith.constant 0 : index
    %71 = vector.load %arg5[%c8_68, %c0_69, %c0_70] : memref<9x128x128xf32, #tpu.memory_space<vmem>>, vector<1x128x128xf32>
    %72 = vector.shape_cast %71 : vector<1x128x128xf32> to vector<128x128xf32>
    %cst_71 = arith.constant dense<0.000000e+00> : vector<32x128xf32>
    %73 = tpu.matmul %70, %72, %cst_71 {dimension_numbers = #tpu.dot_dimension_numbers<[1], [0], [0], [1], [0, 0, 1, 1], [], []>} : vector<32x128xf32>, vector<128x128xf32>, vector<32x128xf32> -> vector<32x128xf32>
    %74 = arith.addf %67, %73 : vector<32x128xf32>
    %c0_72 = arith.constant 0 : index
    %c0_73 = arith.constant 0 : index
    %75 = vector.load %arg6[%c0_72, %c0_73] : memref<1x128xf32, #tpu.memory_space<vmem>>, vector<1x128xf32>
    %76 = vector.broadcast %75 : vector<1x128xf32> to vector<32x128xf32>
    %77 = arith.addf %74, %76 : vector<32x128xf32>
    %cst_74 = arith.constant 0.000000e+00 : f32
    %78 = vector.broadcast %cst_74 : f32 to vector<32x128xf32>
    %79 = arith.cmpf oge, %77, %78 : vector<32x128xf32>
    %cst_75 = arith.constant 2.000000e-01 : f32
    %80 = vector.broadcast %cst_75 : f32 to vector<32x128xf32>
    %81 = arith.mulf %80, %77 : vector<32x128xf32>
    %82 = arith.select %79, %77, %81 : vector<32x128xi1>, vector<32x128xf32>
    %c0_76 = arith.constant 0 : index
    %c0_77 = arith.constant 0 : index
    %83 = vector.load %arg7[%c0_76, %c0_77] : memref<32x128xf32, #tpu.memory_space<vmem>>, vector<32x128xf32>
    %84 = arith.mulf %82, %83 : vector<32x128xf32>
    %c0_78 = arith.constant 0 : index
    %c0_79 = arith.constant 0 : index
    %85 = vector.load %arg8[%c0_78, %c0_79] : memref<2x32xf32, #tpu.memory_space<vmem>>, vector<2x32xf32>
    %cst_80 = arith.constant dense<0.000000e+00> : vector<2x128xf32>
    %86 = tpu.matmul %85, %84, %cst_80 {dimension_numbers = #tpu.dot_dimension_numbers<[1], [0], [0], [1], [0, 0, 1, 1], [], []>} : vector<2x32xf32>, vector<32x128xf32>, vector<2x128xf32> -> vector<2x128xf32>
    %cst_81 = arith.constant dense<0.000000e+00> : vector<2xf32>
    %87 = vector.multi_reduction <add>, %86, %cst_81 [1] : vector<2x128xf32> to vector<2xf32>
    %88 = vector.shape_cast %87 : vector<2xf32> to vector<2x1xf32>
    %c0_82 = arith.constant 0 : index
    %89 = memref.load %arg9[%c0_82] : memref<1xf32, #tpu.memory_space<smem>>
    %90 = vector.broadcast %89 : f32 to vector<2x1xf32>
    %91 = arith.addf %88, %90 : vector<2x1xf32>
    %92 = vector.shape_cast %91 : vector<2x1xf32> to vector<2x1xf32>
    %93 = vector.broadcast %92 : vector<2x1xf32> to vector<2x128xf32>
    %c0_83 = arith.constant 0 : index
    %c0_84 = arith.constant 0 : index
    %94 = vector.load %arg10[%c0_83, %c0_84] : memref<2x128xf32, #tpu.memory_space<vmem>>, vector<2x128xf32>
    tpu.vector_store %arg10[%c0_83, %c0_84], %93 {strides = array<i32>} : memref<2x128xf32, #tpu.memory_space<vmem>>, vector<2x128xf32>,
    return
  }
  func.func @transform_0(%arg0: i32) -> (i32, i32) {
    %c0_i32 = arith.constant 0 : i32
    %c0_i32_0 = arith.constant 0 : i32
    %c0_i32_1 = arith.constant 0 : i32
    return %c0_i32, %c0_i32_0 : i32, i32
  }
  func.func @transform_1(%arg0: i32) -> (i32, i32) {
    %c0_i32 = arith.constant 0 : i32
    %c0_i32_0 = arith.constant 0 : i32
    %c0_i32_1 = arith.constant 0 : i32
    return %c0_i32, %c0_i32_0 : i32, i32
  }
  func.func @transform_2(%arg0: i32) -> (i32, i32) {
    %c0_i32 = arith.constant 0 : i32
    %c0_i32_0 = arith.constant 0 : i32
    %c0_i32_1 = arith.constant 0 : i32
    return %c0_i32, %c0_i32_0 : i32, i32
  }
  func.func @transform_3(%arg0: i32) -> (i32, i32, i32) {
    %c0_i32 = arith.constant 0 : i32
    %c0_i32_0 = arith.constant 0 : i32
    %c0_i32_1 = arith.constant 0 : i32
    %c0_i32_2 = arith.constant 0 : i32
    return %c0_i32, %c0_i32_0, %c0_i32_1 : i32, i32, i32
  }
  func.func @transform_4(%arg0: i32) -> (i32, i32, i32) {
    %c0_i32 = arith.constant 0 : i32
    %c0_i32_0 = arith.constant 0 : i32
    %c0_i32_1 = arith.constant 0 : i32
    %c0_i32_2 = arith.constant 0 : i32
    return %c0_i32, %c0_i32_0, %c0_i32_1 : i32, i32, i32
  }
  func.func @transform_5(%arg0: i32) -> (i32, i32) {
    %c0_i32 = arith.constant 0 : i32
    %c0_i32_0 = arith.constant 0 : i32
    %c0_i32_1 = arith.constant 0 : i32
    return %c0_i32, %c0_i32_0 : i32, i32
  }
  func.func @transform_6(%arg0: i32) -> (i32, i32) {
    %c0_i32 = arith.constant 0 : i32
    %c0_i32_0 = arith.constant 0 : i32
    %c0_i32_1 = arith.constant 0 : i32
    return %c0_i32, %c0_i32_0 : i32, i32
  }
  func.func @transform_7(%arg0: i32) -> (i32, i32) {
    %c0_i32 = arith.constant 0 : i32
    %c0_i32_0 = arith.constant 0 : i32
    %c0_i32_1 = arith.constant 0 : i32
    return %c0_i32, %c0_i32_0 : i32, i32
  }
  func.func @transform_8(%arg0: i32) -> i32 {
    %c0_i32 = arith.constant 0 : i32
    %c0_i32_0 = arith.constant 0 : i32
    return %c0_i32 : i32
  }
  func.func @transform_9(%arg0: i32) -> (i32, i32) {
    %c0_i32 = arith.constant 0 : i32
    %c0_i32_0 = arith.constant 0 : i32
    %c0_i32_1 = arith.constant 0 : i32
    return %c0_i32, %c0_i32_0 : i32, i32
  }
}

</mosaic_0001>

<llo_original>
// kernel: discriminator_m.1
$region0: #{discriminator_m.1}
  #allocation0 [shape = 'u32[]', space=smem, size = 0x4, offset = 0x4, fixed_abs, tag = 'smem constant byte address 0x4 - core index']
  #allocation1 [shape = 'u32[144,128]{1,0:T(1,128)}', space=vmem, size = 0x12000, scoped, tag = 'internal scratch']
  #allocation2 [shape = 'f32[1]{0:T(128)S(6)}', space=smem, size = 0x200, scoped, tag = 'scoped memory for discriminator_m.1']
  %s0 = inlined_call_operand.vmem [shape: f32[128,128], index: 0, kind: input, shape index: {}]
  %s1 = inlined_call_operand.vmem [shape: f32[128,128], index: 1, kind: input, shape index: {}]
  %s2 = inlined_call_operand.vmem [shape: f32[1,128], index: 2, kind: input, shape index: {}]
  %s3 = inlined_call_operand.vmem [shape: f32[9,32,128], index: 3, kind: input, shape index: {}]
  %s4 = inlined_call_operand.vmem [shape: f32[9,128,128], index: 4, kind: input, shape index: {}]
  %s5 = inlined_call_operand.vmem [shape: f32[1,128], index: 5, kind: input, shape index: {}]
  %s6 = inlined_call_operand.vmem [shape: f32[32,128], index: 6, kind: input, shape index: {}]
  %s7 = inlined_call_operand.vmem [shape: f32[2,32], index: 7, kind: input, shape index: {}]
  %s8 = inlined_call_operand.<no memory space> [shape: f32[1], index: 8, kind: input, shape index: {}]
  %s9 = inlined_call_operand.vmem [shape: f32[2,128], index: 9, kind: output, shape index: {}]
  %s10 = sld [smem:[#allocation0]]
  $region46: #{discriminator_m.1} parent=0
    _
  %s12 = ssub.s32 1, %s10
  %s13 = scalar_select 0, %s12, %s10
  %14 = sst [smem:[#allocation2]] %s8
  // Predicated region
  $region2: #{discriminator_m.1} parent=0 // pred_check
    _
  $region3: #{discriminator_m.1} parent=0 // pred_check_branch
    %16 = sbr.rel (0) target = $region5
  $region4: #{discriminator_m.1} parent=0 // pred_region
    _
  $region5: #{discriminator_m.1} parent=0 // pred_fallthru
    _
  // Predicated region
  $region6: #{discriminator_m.1} parent=0 // pred_check
    _
  $region7: #{discriminator_m.1} parent=0 // pred_check_branch
    %18 = sbr.rel (0) target = $region9
  $region8: #{discriminator_m.1} parent=0 // pred_region
    _
  $region9: #{discriminator_m.1} parent=0 // pred_fallthru
    _
  // Predicated region
  $region10: #{discriminator_m.1} parent=0 // pred_check
    _
  $region11: #{discriminator_m.1} parent=0 // pred_check_branch
    %20 = sbr.rel (0) target = $region13
  $region12: #{discriminator_m.1} parent=0 // pred_region
    _
  $region13: #{discriminator_m.1} parent=0 // pred_fallthru
    _
  // Predicated region
  $region14: #{discriminator_m.1} parent=0 // pred_check
    _
  $region15: #{discriminator_m.1} parent=0 // pred_check_branch
    %22 = sbr.rel (0) target = $region17
  $region16: #{discriminator_m.1} parent=0 // pred_region
    _
  $region17: #{discriminator_m.1} parent=0 // pred_fallthru
    _
  // Predicated region
  $region18: #{discriminator_m.1} parent=0 // pred_check
    _
  $region19: #{discriminator_m.1} parent=0 // pred_check_branch
    %24 = sbr.rel (0) target = $region21
  $region20: #{discriminator_m.1} parent=0 // pred_region
    _
  $region21: #{discriminator_m.1} parent=0 // pred_fallthru
    _
  // Predicated region
  $region22: #{discriminator_m.1} parent=0 // pred_check
    _
  $region23: #{discriminator_m.1} parent=0 // pred_check_branch
    %26 = sbr.rel (0) target = $region25
  $region24: #{discriminator_m.1} parent=0 // pred_region
    _
  $region25: #{discriminator_m.1} parent=0 // pred_fallthru
    _
  // Predicated region
  $region26: #{discriminator_m.1} parent=0 // pred_check
    _
  $region27: #{discriminator_m.1} parent=0 // pred_check_branch
    %28 = sbr.rel (0) target = $region29
  $region28: #{discriminator_m.1} parent=0 // pred_region
    _
  $region29: #{discriminator_m.1} parent=0 // pred_fallthru
    _
  // Predicated region
  $region30: #{discriminator_m.1} parent=0 // pred_check
    _
  $region31: #{discriminator_m.1} parent=0 // pred_check_branch
    %30 = sbr.rel (0) target = $region33
  $region32: #{discriminator_m.1} parent=0 // pred_region
    _
  $region33: #{discriminator_m.1} parent=0 // pred_fallthru
    _
  // Predicated region
  $region34: #{discriminator_m.1} parent=0 // pred_check
    _
  $region35: #{discriminator_m.1} parent=0 // pred_check_branch
    %32 = sbr.rel (0) target = $region37
  $region36: #{discriminator_m.1} parent=0 // pred_region
    _
  $region37: #{discriminator_m.1} parent=0 // pred_fallthru
    _
  %v33 = vld [vmem:[%s0] sm:$0xff]
  %v34 = vld [vmem:[%s0 + $0x8] sm:$0xff]
  %v35 = vld [vmem:[%s0 + $0x10] sm:$0xff]
  %v36 = vld [vmem:[%s0 + $0x18] sm:$0xff]
  %v37 = vld [vmem:[%s0 + $0x20] sm:$0xff]
  %v38 = vld [vmem:[%s0 + $0x28] sm:$0xff]
  %v39 = vld [vmem:[%s0 + $0x30] sm:$0xff]
  %v40 = vld [vmem:[%s0 + $0x38] sm:$0xff]
  %v41 = vld [vmem:[%s0 + $0x40] sm:$0xff]
  %v42 = vld [vmem:[%s0 + $0x48] sm:$0xff]
  %v43 = vld [vmem:[%s0 + $0x50] sm:$0xff]
  %v44 = vld [vmem:[%s0 + $0x58] sm:$0xff]
  %v45 = vld [vmem:[%s0 + $0x60] sm:$0xff]
  %v46 = vld [vmem:[%s0 + $0x68] sm:$0xff]
  %v47 = vld [vmem:[%s0 + $0x70] sm:$0xff]
  %v48 = vld [vmem:[%s0 + $0x78] sm:$0xff]
  %v49 = vld [vmem:[%s1] sm:$0xff]
  %v50 = vld [vmem:[%s1 + $0x8] sm:$0xff]
  %v51 = vld [vmem:[%s1 + $0x10] sm:$0xff]
  %v52 = vld [vmem:[%s1 + $0x18] sm:$0xff]
  %v53 = vld [vmem:[%s1 + $0x20] sm:$0xff]
  %v54 = vld [vmem:[%s1 + $0x28] sm:$0xff]
  %v55 = vld [vmem:[%s1 + $0x30] sm:$0xff]
  %v56 = vld [vmem:[%s1 + $0x38] sm:$0xff]
  %v57 = vld [vmem:[%s1 + $0x40] sm:$0xff]
  %v58 = vld [vmem:[%s1 + $0x48] sm:$0xff]
  %v59 = vld [vmem:[%s1 + $0x50] sm:$0xff]
  %v60 = vld [vmem:[%s1 + $0x58] sm:$0xff]
  %v61 = vld [vmem:[%s1 + $0x60] sm:$0xff]
  %v62 = vld [vmem:[%s1 + $0x68] sm:$0xff]
  %v63 = vld [vmem:[%s1 + $0x70] sm:$0xff]
  %v64 = vld [vmem:[%s1 + $0x78] sm:$0xff]
  %v65 = vld [vmem:[%s2] sm:$0x1]
  %v67 = vlaneseq
  %v68 = vshrl.u32 %v67, 7
  %v69 = vsub.s32 0, %v68
  %v70 = vrot.slane %v65, %v69
  %72 = vmatprep.subr.mxu0 0.0
  %73 = vmatpush1.msra.mxu0 %v49
  %74 = vmatprep.subr.mxu0 0.0
  %75 = vmatpush1.msra.mxu0 %v50
  %76 = vmatprep.subr.mxu0 0.0
  %77 = vmatpush1.msra.mxu0 %v51
  %78 = vmatprep.subr.mxu0 0.0
  %79 = vmatpush1.msra.mxu0 %v52
  %80 = vmatprep.subr.mxu0 0.0
  %81 = vmatpush1.msra.mxu0 %v53
  %82 = vmatprep.subr.mxu0 0.0
  %83 = vmatpush1.msra.mxu0 %v54
  %84 = vmatprep.subr.mxu0 0.0
  %85 = vmatpush1.msra.mxu0 %v55
  %86 = vmatprep.subr.mxu0 0.0
  %87 = vmatpush1.msra.mxu0 %v56
  %88 = vmatprep.subr.mxu0 0.0
  %89 = vmatpush1.msra.mxu0 %v57
  %90 = vmatprep.subr.mxu0 0.0
  %91 = vmatpush1.msra.mxu0 %v58
  %92 = vmatprep.subr.mxu0 0.0
  %93 = vmatpush1.msra.mxu0 %v59
  %94 = vmatprep.subr.mxu0 0.0
  %95 = vmatpush1.msra.mxu0 %v60
  %96 = vmatprep.subr.mxu0 0.0
  %97 = vmatpush1.msra.mxu0 %v61
  %98 = vmatprep.subr.mxu0 0.0
  %99 = vmatpush1.msra.mxu0 %v62
  %100 = vmatprep.subr.mxu0 0.0
  %101 = vmatpush1.msra.mxu0 %v63
  %102 = vmatprep.subr.mxu0 0.0
  %103 = vmatpush1.msra.mxu0 %v64
  %104 = vmatprep.subr.mxu0 0.0
  %105 = vmatpush1.msra.mxu0 0.0
  %106 = vmatprep.subr.mxu0 0.0
  %107 = vmatpush1.msra.mxu0 0.0
  %108 = vmatprep.subr.mxu0 0.0
  %109 = vmatpush1.msra.mxu0 0.0
  %110 = vmatprep.subr.mxu0 0.0
  %111 = vmatpush1.msra.mxu0 0.0
  %112 = vmatprep.subr.mxu0 0.0
  %113 = vmatpush1.msra.mxu0 0.0
  %114 = vmatprep.subr.mxu0 0.0
  %115 = vmatpush1.msra.mxu0 0.0
  %116 = vmatprep.subr.mxu0 0.0
  %117 = vmatpush1.msra.mxu0 0.0
  %118 = vmatprep.subr.mxu0 0.0
  %119 = vmatpush1.msra.mxu0 0.0
  %120 = vmatprep.subr.mxu0 0.0
  %121 = vmatpush1.msra.mxu0 0.0
  %122 = vmatprep.subr.mxu0 0.0
  %123 = vmatpush1.msra.mxu0 0.0
  %124 = vmatprep.subr.mxu0 0.0
  %125 = vmatpush1.msra.mxu0 0.0
  %126 = vmatprep.subr.mxu0 0.0
  %127 = vmatpush1.msra.mxu0 0.0
  %128 = vmatprep.subr.mxu0 0.0
  %129 = vmatpush1.msra.mxu0 0.0
  %130 = vmatprep.subr.mxu0 0.0
  %131 = vmatpush1.msra.mxu0 0.0
  %132 = vmatprep.subr.mxu0 0.0
  %133 = vmatpush1.msra.mxu0 0.0
  %134 = vmatprep.subr.mxu0 0.0
  %135 = vmatpush1.msra.mxu0 0.0
  %136 = vmatprep.mubr.f32.mxu0 0.0
  %137 = vmatmul.mubr.f32.gmra.mrb[0].mxu0 %v33
  %v138 = vpop.f32.mrb[0].mxu0
  %v139 = vadd.f32 %v70, %v138
  %v140 = vpop.f32.mrb[0].mxu0
  %141 = vmatprep.mubr.f32.mxu0 0.0
  %142 = vmatmul.mubr.f32.gmra.mrb[0].mxu0 %v34
  %v143 = vpop.f32.mrb[0].mxu0
  %v144 = vadd.f32 %v70, %v143
  %v145 = vpop.f32.mrb[0].mxu0
  %146 = vmatprep.mubr.f32.mxu0 0.0
  %147 = vmatmul.mubr.f32.gmra.mrb[0].mxu0 %v35
  %v148 = vpop.f32.mrb[0].mxu0
  %v149 = vadd.f32 %v70, %v148
  %v150 = vpop.f32.mrb[0].mxu0
  %151 = vmatprep.mubr.f32.mxu0 0.0
  %152 = vmatmul.mubr.f32.gmra.mrb[0].mxu0 %v36
  %v153 = vpop.f32.mrb[0].mxu0
  %v154 = vadd.f32 %v70, %v153
  %v155 = vpop.f32.mrb[0].mxu0
  %156 = vmatprep.mubr.f32.mxu0 0.0
  %157 = vmatmul.mubr.f32.gmra.mrb[0].mxu0 %v37
  %v158 = vpop.f32.mrb[0].mxu0
  %v159 = vadd.f32 %v70, %v158
  %v160 = vpop.f32.mrb[0].mxu0
  %161 = vmatprep.mubr.f32.mxu0 0.0
  %162 = vmatmul.mubr.f32.gmra.mrb[0].mxu0 %v38
  %v163 = vpop.f32.mrb[0].mxu0
  %v164 = vadd.f32 %v70, %v163
  %v165 = vpop.f32.mrb[0].mxu0
  %166 = vmatprep.mubr.f32.mxu0 0.0
  %167 = vmatmul.mubr.f32.gmra.mrb[0].mxu0 %v39
  %v168 = vpop.f32.mrb[0].mxu0
  %v169 = vadd.f32 %v70, %v168
  %v170 = vpop.f32.mrb[0].mxu0
  %171 = vmatprep.mubr.f32.mxu0 0.0
  %172 = vmatmul.mubr.f32.gmra.mrb[0].mxu0 %v40
  %v173 = vpop.f32.mrb[0].mxu0
  %v174 = vadd.f32 %v70, %v173
  %v175 = vpop.f32.mrb[0].mxu0
  %176 = vmatprep.mubr.f32.mxu0 0.0
  %177 = vmatmul.mubr.f32.gmra.mrb[0].mxu0 %v41
  %v178 = vpop.f32.mrb[0].mxu0
  %v179 = vadd.f32 %v70, %v178
  %v180 = vpop.f32.mrb[0].mxu0
  %181 = vmatprep.mubr.f32.mxu0 0.0
  %182 = vmatmul.mubr.f32.gmra.mrb[0].mxu0 %v42
  %v183 = vpop.f32.mrb[0].mxu0
  %v184 = vadd.f32 %v70, %v183
  %v185 = vpop.f32.mrb[0].mxu0
  %186 = vmatprep.mubr.f32.mxu0 0.0
  %187 = vmatmul.mubr.f32.gmra.mrb[0].mxu0 %v43
  %v188 = vpop.f32.mrb[0].mxu0
  %v189 = vadd.f32 %v70, %v188
  %v190 = vpop.f32.mrb[0].mxu0
  %191 = vmatprep.mubr.f32.mxu0 0.0
  %192 = vmatmul.mubr.f32.gmra.mrb[0].mxu0 %v44
  %v193 = vpop.f32.mrb[0].mxu0
  %v194 = vadd.f32 %v70, %v193
  %v195 = vpop.f32.mrb[0].mxu0
  %196 = vmatprep.mubr.f32.mxu0 0.0
  %197 = vmatmul.mubr.f32.gmra.mrb[0].mxu0 %v45
  %v198 = vpop.f32.mrb[0].mxu0
  %v199 = vadd.f32 %v70, %v198
  %v200 = vpop.f32.mrb[0].mxu0
  %201 = vmatprep.mubr.f32.mxu0 0.0
  %202 = vmatmul.mubr.f32.gmra.mrb[0].mxu0 %v46
  %v203 = vpop.f32.mrb[0].mxu0
  %v204 = vadd.f32 %v70, %v203
  %v205 = vpop.f32.mrb[0].mxu0
  %206 = vmatprep.mubr.f32.mxu0 0.0
  %207 = vmatmul.mubr.f32.gmra.mrb[0].mxu0 %v47
  %v208 = vpop.f32.mrb[0].mxu0
  %v209 = vadd.f32 %v70, %v208
  %v210 = vpop.f32.mrb[0].mxu0
  %211 = vmatprep.mubr.f32.mxu0 0.0
  %212 = vmatmul.mubr.f32.gmra.mrb[0].mxu0 %v48
  %v213 = vpop.f32.mrb[0].mxu0
  %v214 = vadd.f32 %v70, %v213
  %v215 = vpop.f32.mrb[0].mxu0
  %216 = vdwg.mxu0
  %vm217 = vcmp.ge.f32.partialorder %v139, 0.0
  %vm218 = vcmp.ge.f32.partialorder %v144, 0.0
  %vm219 = vcmp.ge.f32.partialorder %v149, 0.0
  %vm220 = vcmp.ge.f32.partialorder %v154, 0.0
  %vm221 = vcmp.ge.f32.partialorder %v159, 0.0
  %vm222 = vcmp.ge.f32.partialorder %v164, 0.0
  %vm223 = vcmp.ge.f32.partialorder %v169, 0.0
  %vm224 = vcmp.ge.f32.partialorder %v174, 0.0
  %vm225 = vcmp.ge.f32.partialorder %v179, 0.0
  %vm226 = vcmp.ge.f32.partialorder %v184, 0.0
  %vm227 = vcmp.ge.f32.partialorder %v189, 0.0
  %vm228 = vcmp.ge.f32.partialorder %v194, 0.0
  %vm229 = vcmp.ge.f32.partialorder %v199, 0.0
  %vm230 = vcmp.ge.f32.partialorder %v204, 0.0
  %vm231 = vcmp.ge.f32.partialorder %v209, 0.0
  %vm232 = vcmp.ge.f32.partialorder %v214, 0.0
  %v233 = vmul.f32 %v139, 0.2
  %v234 = vmul.f32 %v144, 0.2
  %v235 = vmul.f32 %v149, 0.2
  %v236 = vmul.f32 %v154, 0.2
  %v237 = vmul.f32 %v159, 0.2
  %v238 = vmul.f32 %v164, 0.2
  %v239 = vmul.f32 %v169, 0.2
  %v240 = vmul.f32 %v174, 0.2
  %v241 = vmul.f32 %v179, 0.2
  %v242 = vmul.f32 %v184, 0.2
  %v243 = vmul.f32 %v189, 0.2
  %v244 = vmul.f32 %v194, 0.2
  %v245 = vmul.f32 %v199, 0.2
  %v246 = vmul.f32 %v204, 0.2
  %v247 = vmul.f32 %v209, 0.2
  %v248 = vmul.f32 %v214, 0.2
  %v249 = vsel %vm217, %v139, %v233
  %v250 = vsel %vm218, %v144, %v234
  %v251 = vsel %vm219, %v149, %v235
  %v252 = vsel %vm220, %v154, %v236
  %v253 = vsel %vm221, %v159, %v237
  %v254 = vsel %vm222, %v164, %v238
  %v255 = vsel %vm223, %v169, %v239
  %v256 = vsel %vm224, %v174, %v240
  %v257 = vsel %vm225, %v179, %v241
  %v258 = vsel %vm226, %v184, %v242
  %v259 = vsel %vm227, %v189, %v243
  %v260 = vsel %vm228, %v194, %v244
  %v261 = vsel %vm229, %v199, %v245
  %v262 = vsel %vm230, %v204, %v246
  %v263 = vsel %vm231, %v209, %v247
  %v264 = vsel %vm232, %v214, %v248
  %v265 = vld [vmem:[%s3] sm:$0xff]
  %v266 = vld [vmem:[%s3 + $0x8] sm:$0xff]
  %v267 = vld [vmem:[%s3 + $0x10] sm:$0xff]
  %v268 = vld [vmem:[%s3 + $0x18] sm:$0xff]
  %269 = vmatprep.subr.mxu0 0.0
  %270 = vmatpush1.msra.mxu0 %v249
  %271 = vmatprep.subr.mxu0 0.0
  %272 = vmatpush1.msra.mxu0 %v250
  %273 = vmatprep.subr.mxu0 0.0
  %274 = vmatpush1.msra.mxu0 %v251
  %275 = vmatprep.subr.mxu0 0.0
  %276 = vmatpush1.msra.mxu0 %v252
  %277 = vmatprep.subr.mxu0 0.0
  %278 = vmatpush1.msra.mxu0 %v253
  %279 = vmatprep.subr.mxu0 0.0
  %280 = vmatpush1.msra.mxu0 %v254
  %281 = vmatprep.subr.mxu0 0.0
  %282 = vmatpush1.msra.mxu0 %v255
  %283 = vmatprep.subr.mxu0 0.0
  %284 = vmatpush1.msra.mxu0 %v256
  %285 = vmatprep.subr.mxu0 0.0
  %286 = vmatpush1.msra.mxu0 %v257
  %287 = vmatprep.subr.mxu0 0.0
  %288 = vmatpush1.msra.mxu0 %v258
  %289 = vmatprep.subr.mxu0 0.0
  %290 = vmatpush1.msra.mxu0 %v259
  %291 = vmatprep.subr.mxu0 0.0
  %292 = vmatpush1.msra.mxu0 %v260
  %293 = vmatprep.subr.mxu0 0.0
  %294 = vmatpush1.msra.mxu0 %v261
  %295 = vmatprep.subr.mxu0 0.0
  %296 = vmatpush1.msra.mxu0 %v262
  %297 = vmatprep.subr.mxu0 0.0
  %298 = vmatpush1.msra.mxu0 %v263
  %299 = vmatprep.subr.mxu0 0.0
  %300 = vmatpush1.msra.mxu0 %v264
  %301 = vmatprep.subr.mxu0 0.0
  %302 = vmatpush1.msra.mxu0 0.0
  %303 = vmatprep.subr.mxu0 0.0
  %304 = vmatpush1.msra.mxu0 0.0
  %305 = vmatprep.subr.mxu0 0.0
  %306 = vmatpush1.msra.mxu0 0.0
  %307 = vmatprep.subr.mxu0 0.0
  %308 = vmatpush1.msra.mxu0 0.0
  %309 = vmatprep.subr.mxu0 0.0
  %310 = vmatpush1.msra.mxu0 0.0
  %311 = vmatprep.subr.mxu0 0.0
  %312 = vmatpush1.msra.mxu0 0.0
  %313 = vmatprep.subr.mxu0 0.0
  %314 = vmatpush1.msra.mxu0 0.0
  %315 = vmatprep.subr.mxu0 0.0
  %316 = vmatpush1.msra.mxu0 0.0
  %317 = vmatprep.subr.mxu0 0.0
  %318 = vmatpush1.msra.mxu0 0.0
  %319 = vmatprep.subr.mxu0 0.0
  %320 = vmatpush1.msra.mxu0 0.0
  %321 = vmatprep.subr.mxu0 0.0
  %322 = vmatpush1.msra.mxu0 0.0
  %323 = vmatprep.subr.mxu0 0.0
  %324 = vmatpush1.msra.mxu0 0.0
  %325 = vmatprep.subr.mxu0 0.0
  %326 = vmatpush1.msra.mxu0 0.0
  %327 = vmatprep.subr.mxu0 0.0
  %328 = vmatpush1.msra.mxu0 0.0
  %329 = vmatprep.subr.mxu0 0.0
  %330 = vmatpush1.msra.mxu0 0.0
  %331 = vmatprep.subr.mxu0 0.0
  %332 = vmatpush1.msra.mxu0 0.0
  %333 = vmatprep.mubr.f32.mxu0 0.0
  %334 = vmatmul.mubr.f32.gmra.mrb[0].mxu0 %v265
  %v335 = vpop.f32.mrb[0].mxu0
  %v336 = vadd.f32 0.0, %v335
  %v337 = vpop.f32.mrb[0].mxu0
  %338 = vmatprep.mubr.f32.mxu0 0.0
  %339 = vmatmul.mubr.f32.gmra.mrb[0].mxu0 %v266
  %v340 = vpop.f32.mrb[0].mxu0
  %v341 = vadd.f32 0.0, %v340
  %v342 = vpop.f32.mrb[0].mxu0
  %343 = vmatprep.mubr.f32.mxu0 0.0
  %344 = vmatmul.mubr.f32.gmra.mrb[0].mxu0 %v267
  %v345 = vpop.f32.mrb[0].mxu0
  %v346 = vadd.f32 0.0, %v345
  %v347 = vpop.f32.mrb[0].mxu0
  %348 = vmatprep.mubr.f32.mxu0 0.0
  %349 = vmatmul.mubr.f32.gmra.mrb[0].mxu0 %v268
  %v350 = vpop.f32.mrb[0].mxu0
  %v351 = vadd.f32 0.0, %v350
  %v352 = vpop.f32.mrb[0].mxu0
  %353 = vdwg.mxu0
  %v354 = vld [vmem:[%s4] sm:$0xff]
  %v355 = vld [vmem:[%s4 + $0x8] sm:$0xff]
  %v356 = vld [vmem:[%s4 + $0x10] sm:$0xff]
  %v357 = vld [vmem:[%s4 + $0x18] sm:$0xff]
  %v358 = vld [vmem:[%s4 + $0x20] sm:$0xff]
  %v359 = vld [vmem:[%s4 + $0x28] sm:$0xff]
  %v360 = vld [vmem:[%s4 + $0x30] sm:$0xff]
  %v361 = vld [vmem:[%s4 + $0x38] sm:$0xff]
  %v362 = vld [vmem:[%s4 + $0x40] sm:$0xff]
  %v363 = vld [vmem:[%s4 + $0x48] sm:$0xff]
  %v364 = vld [vmem:[%s4 + $0x50] sm:$0xff]
  %v365 = vld [vmem:[%s4 + $0x58] sm:$0xff]
  %v366 = vld [vmem:[%s4 + $0x60] sm:$0xff]
  %v367 = vld [vmem:[%s4 + $0x68] sm:$0xff]
  %v368 = vld [vmem:[%s4 + $0x70] sm:$0xff]
  %v369 = vld [vmem:[%s4 + $0x78] sm:$0xff]
  %s370 = scalar_lea.vmem %s3, 32
  %v371 = vld [vmem:[%s370] sm:$0xff]
  %v372 = vld [vmem:[%s370 + $0x8] sm:$0xff]
  %v373 = vld [vmem:[%s370 + $0x10] sm:$0xff]
  %v374 = vld [vmem:[%s370 + $0x18] sm:$0xff]
  %375 = vmatprep.subr.mxu0 0.0
  %376 = vmatpush1.msra.mxu0 %v249
  %377 = vmatprep.subr.mxu0 0.0
  %378 = vmatpush1.msra.mxu0 %v250
  %379 = vmatprep.subr.mxu0 0.0
  %380 = vmatpush1.msra.mxu0 %v251
  %381 = vmatprep.subr.mxu0 0.0
  %382 = vmatpush1.msra.mxu0 %v252
  %383 = vmatprep.subr.mxu0 0.0
  %384 = vmatpush1.msra.mxu0 %v253
  %385 = vmatprep.subr.mxu0 0.0
  %386 = vmatpush1.msra.mxu0 %v254
  %387 = vmatprep.subr.mxu0 0.0
  %388 = vmatpush1.msra.mxu0 %v255
  %389 = vmatprep.subr.mxu0 0.0
  %390 = vmatpush1.msra.mxu0 %v256
  %391 = vmatprep.subr.mxu0 0.0
  %392 = vmatpush1.msra.mxu0 %v257
  %393 = vmatprep.subr.mxu0 0.0
  %394 = vmatpush1.msra.mxu0 %v258
  %395 = vmatprep.subr.mxu0 0.0
  %396 = vmatpush1.msra.mxu0 %v259
  %397 = vmatprep.subr.mxu0 0.0
  %398 = vmatpush1.msra.mxu0 %v260
  %399 = vmatprep.subr.mxu0 0.0
  %400 = vmatpush1.msra.mxu0 %v261
  %401 = vmatprep.subr.mxu0 0.0
  %402 = vmatpush1.msra.mxu0 %v262
  %403 = vmatprep.subr.mxu0 0.0
  %404 = vmatpush1.msra.mxu0 %v263
  %405 = vmatprep.subr.mxu0 0.0
  %406 = vmatpush1.msra.mxu0 %v264
  %407 = vmatprep.subr.mxu0 0.0
  %408 = vmatpush1.msra.mxu0 0.0
  %409 = vmatprep.subr.mxu0 0.0
  %410 = vmatpush1.msra.mxu0 0.0
  %411 = vmatprep.subr.mxu0 0.0
  %412 = vmatpush1.msra.mxu0 0.0
  %413 = vmatprep.subr.mxu0 0.0
  %414 = vmatpush1.msra.mxu0 0.0
  %415 = vmatprep.subr.mxu0 0.0
  %416 = vmatpush1.msra.mxu0 0.0
  %417 = vmatprep.subr.mxu0 0.0
  %418 = vmatpush1.msra.mxu0 0.0
  %419 = vmatprep.subr.mxu0 0.0
  %420 = vmatpush1.msra.mxu0 0.0
  %421 = vmatprep.subr.mxu0 0.0
  %422 = vmatpush1.msra.mxu0 0.0
  %423 = vmatprep.subr.mxu0 0.0
  %424 = vmatpush1.msra.mxu0 0.0
  %425 = vmatprep.subr.mxu0 0.0
  %426 = vmatpush1.msra.mxu0 0.0
  %427 = vmatprep.subr.mxu0 0.0
  %428 = vmatpush1.msra.mxu0 0.0
  %429 = vmatprep.subr.mxu0 0.0
  %430 = vmatpush1.msra.mxu0 0.0
  %431 = vmatprep.subr.mxu0 0.0
  %432 = vmatpush1.msra.mxu0 0.0
  %433 = vmatprep.subr.mxu0 0.0
  %434 = vmatpush1.msra.mxu0 0.0
  %435 = vmatprep.subr.mxu0 0.0
  %436 = vmatpush1.msra.mxu0 0.0
  %437 = vmatprep.subr.mxu0 0.0
  %438 = vmatpush1.msra.mxu0 0.0
  %439 = vmatprep.mubr.f32.mxu0 0.0
  %440 = vmatmul.mubr.f32.gmra.mrb[0].mxu0 %v371
  %v441 = vpop.f32.mrb[0].mxu0
  %v442 = vadd.f32 0.0, %v441
  %v443 = vpop.f32.mrb[0].mxu0
  %444 = vmatprep.mubr.f32.mxu0 0.0
  %445 = vmatmul.mubr.f32.gmra.mrb[0].mxu0 %v372
  %v446 = vpop.f32.mrb[0].mxu0
  %v447 = vadd.f32 0.0, %v446
  %v448 = vpop.f32.mrb[0].mxu0
  %449 = vmatprep.mubr.f32.mxu0 0.0
  %450 = vmatmul.mubr.f32.gmra.mrb[0].mxu0 %v373
  %v451 = vpop.f32.mrb[0].mxu0
  %v452 = vadd.f32 0.0, %v451
  %v453 = vpop.f32.mrb[0].mxu0
  %454 = vmatprep.mubr.f32.mxu0 0.0
  %455 = vmatmul.mubr.f32.gmra.mrb[0].mxu0 %v374
  %v456 = vpop.f32.mrb[0].mxu0
  %v457 = vadd.f32 0.0, %v456
  %v458 = vpop.f32.mrb[0].mxu0
  %459 = vdwg.mxu0
  %s460 = scalar_lea.vmem %s4, 128
  %v461 = vld [vmem:[%s460] sm:$0xff]
  %v462 = vld [vmem:[%s460 + $0x8] sm:$0xff]
  %v463 = vld [vmem:[%s460 + $0x10] sm:$0xff]
  %v464 = vld [vmem:[%s460 + $0x18] sm:$0xff]
  %v465 = vld [vmem:[%s460 + $0x20] sm:$0xff]
  %v466 = vld [vmem:[%s460 + $0x28] sm:$0xff]
  %v467 = vld [vmem:[%s460 + $0x30] sm:$0xff]
  %v468 = vld [vmem:[%s460 + $0x38] sm:$0xff]
  %v469 = vld [vmem:[%s460 + $0x40] sm:$0xff]
  %v470 = vld [vmem:[%s460 + $0x48] sm:$0xff]
  %v471 = vld [vmem:[%s460 + $0x50] sm:$0xff]
  %v472 = vld [vmem:[%s460 + $0x58] sm:$0xff]
  %v473 = vld [vmem:[%s460 + $0x60] sm:$0xff]
  %v474 = vld [vmem:[%s460 + $0x68] sm:$0xff]
  %v475 = vld [vmem:[%s460 + $0x70] sm:$0xff]
  %v476 = vld [vmem:[%s460 + $0x78] sm:$0xff]
  %477 = vmatprep.subr.mxu0 0.0
  %478 = vmatpush1.msra.mxu0 %v461
  %479 = vmatprep.subr.mxu0 0.0
  %480 = vmatpush1.msra.mxu0 %v462
  %481 = vmatprep.subr.mxu0 0.0
  %482 = vmatpush1.msra.mxu0 %v463
  %483 = vmatprep.subr.mxu0 0.0
  %484 = vmatpush1.msra.mxu0 %v464
  %485 = vmatprep.subr.mxu0 0.0
  %486 = vmatpush1.msra.mxu0 %v465
  %487 = vmatprep.subr.mxu0 0.0
  %488 = vmatpush1.msra.mxu0 %v466
  %489 = vmatprep.subr.mxu0 0.0
  %490 = vmatpush1.msra.mxu0 %v467
  %491 = vmatprep.subr.mxu0 0.0
  %492 = vmatpush1.msra.mxu0 %v468
  %493 = vmatprep.subr.mxu0 0.0
  %494 = vmatpush1.msra.mxu0 %v469
  %495 = vmatprep.subr.mxu0 0.0
  %496 = vmatpush1.msra.mxu0 %v470
  %497 = vmatprep.subr.mxu0 0.0
  %498 = vmatpush1.msra.mxu0 %v471
  %499 = vmatprep.subr.mxu0 0.0
  %500 = vmatpush1.msra.mxu0 %v472
  %501 = vmatprep.subr.mxu0 0.0
  %502 = vmatpush1.msra.mxu0 %v473
  %503 = vmatprep.subr.mxu0 0.0
  %504 = vmatpush1.msra.mxu0 %v474
  %505 = vmatprep.subr.mxu0 0.0
  %506 = vmatpush1.msra.mxu0 %v475
  %507 = vmatprep.subr.mxu0 0.0
  %508 = vmatpush1.msra.mxu0 %v476
  %509 = vmatprep.subr.mxu0 0.0
  %510 = vmatpush1.msra.mxu0 0.0
  %511 = vmatprep.subr.mxu0 0.0
  %512 = vmatpush1.msra.mxu0 0.0
  %513 = vmatprep.subr.mxu0 0.0
  %514 = vmatpush1.msra.mxu0 0.0
  %515 = vmatprep.subr.mxu0 0.0
  %516 = vmatpush1.msra.mxu0 0.0
  %517 = vmatprep.subr.mxu0 0.0
  %518 = vmatpush1.msra.mxu0 0.0
  %519 = vmatprep.subr.mxu0 0.0
  %520 = vmatpush1.msra.mxu0 0.0
  %521 = vmatprep.subr.mxu0 0.0
  %522 = vmatpush1.msra.mxu0 0.0
  %523 = vmatprep.subr.mxu0 0.0
  %524 = vmatpush1.msra.mxu0 0.0
  %525 = vmatprep.subr.mxu0 0.0
  %526 = vmatpush1.msra.mxu0 0.0
  %527 = vmatprep.subr.mxu0 0.0
  %528 = vmatpush1.msra.mxu0 0.0
  %529 = vmatprep.subr.mxu0 0.0
  %530 = vmatpush1.msra.mxu0 0.0
  %531 = vmatprep.subr.mxu0 0.0
  %532 = vmatpush1.msra.mxu0 0.0
  %533 = vmatprep.subr.mxu0 0.0
  %534 = vmatpush1.msra.mxu0 0.0
  %535 = vmatprep.subr.mxu0 0.0
  %536 = vmatpush1.msra.mxu0 0.0
  %537 = vmatprep.subr.mxu0 0.0
  %538 = vmatpush1.msra.mxu0 0.0
  %539 = vmatprep.subr.mxu0 0.0
  %540 = vmatpush1.msra.mxu0 0.0
  %541 = vmatprep.mubr.f32.mxu0 0.0
  %542 = vmatmul.mubr.f32.gmra.mrb[0].mxu0 %v442
  %v543 = vpop.f32.mrb[0].mxu0
  %v544 = vadd.f32 0.0, %v543
  %v545 = vpop.f32.mrb[0].mxu0
  %546 = vmatprep.mubr.f32.mxu0 0.0
  %547 = vmatmul.mubr.f32.gmra.mrb[0].mxu0 %v447
  %v548 = vpop.f32.mrb[0].mxu0
  %v549 = vadd.f32 0.0, %v548
  %v550 = vpop.f32.mrb[0].mxu0
  %551 = vmatprep.mubr.f32.mxu0 0.0
  %552 = vmatmul.mubr.f32.gmra.mrb[0].mxu0 %v452
  %v553 = vpop.f32.mrb[0].mxu0
  %v554 = vadd.f32 0.0, %v553
  %v555 = vpop.f32.mrb[0].mxu0
  %556 = vmatprep.mubr.f32.mxu0 0.0
  %557 = vmatmul.mubr.f32.gmra.mrb[0].mxu0 %v457
  %v558 = vpop.f32.mrb[0].mxu0
  %v559 = vadd.f32 0.0, %v558
  %v560 = vpop.f32.mrb[0].mxu0
  %561 = vdwg.mxu0
  %562 = vmatprep.subr.mxu0 0.0
  %563 = vmatpush1.msra.mxu0 %v354
  %564 = vmatprep.subr.mxu0 0.0
  %565 = vmatpush1.msra.mxu0 %v355
  %566 = vmatprep.subr.mxu0 0.0
  %567 = vmatpush1.msra.mxu0 %v356
  %568 = vmatprep.subr.mxu0 0.0
  %569 = vmatpush1.msra.mxu0 %v357
  %570 = vmatprep.subr.mxu0 0.0
  %571 = vmatpush1.msra.mxu0 %v358
  %572 = vmatprep.subr.mxu0 0.0
  %573 = vmatpush1.msra.mxu0 %v359
  %574 = vmatprep.subr.mxu0 0.0
  %575 = vmatpush1.msra.mxu0 %v360
  %576 = vmatprep.subr.mxu0 0.0
  %577 = vmatpush1.msra.mxu0 %v361
  %578 = vmatprep.subr.mxu0 0.0
  %579 = vmatpush1.msra.mxu0 %v362
  %580 = vmatprep.subr.mxu0 0.0
  %581 = vmatpush1.msra.mxu0 %v363
  %582 = vmatprep.subr.mxu0 0.0
  %583 = vmatpush1.msra.mxu0 %v364
  %584 = vmatprep.subr.mxu0 0.0
  %585 = vmatpush1.msra.mxu0 %v365
  %586 = vmatprep.subr.mxu0 0.0
  %587 = vmatpush1.msra.mxu0 %v366
  %588 = vmatprep.subr.mxu0 0.0
  %589 = vmatpush1.msra.mxu0 %v367
  %590 = vmatprep.subr.mxu0 0.0
  %591 = vmatpush1.msra.mxu0 %v368
  %592 = vmatprep.subr.mxu0 0.0
  %593 = vmatpush1.msra.mxu0 %v369
  %594 = vmatprep.subr.mxu0 0.0
  %595 = vmatpush1.msra.mxu0 0.0
  %596 = vmatprep.subr.mxu0 0.0
  %597 = vmatpush1.msra.mxu0 0.0
  %598 = vmatprep.subr.mxu0 0.0
  %599 = vmatpush1.msra.mxu0 0.0
  %600 = vmatprep.subr.mxu0 0.0
  %601 = vmatpush1.msra.mxu0 0.0
  %602 = vmatprep.subr.mxu0 0.0
  %603 = vmatpush1.msra.mxu0 0.0
  %604 = vmatprep.subr.mxu0 0.0
  %605 = vmatpush1.msra.mxu0 0.0
  %606 = vmatprep.subr.mxu0 0.0
  %607 = vmatpush1.msra.mxu0 0.0
  %608 = vmatprep.subr.mxu0 0.0
  %609 = vmatpush1.msra.mxu0 0.0
  %610 = vmatprep.subr.mxu0 0.0
  %611 = vmatpush1.msra.mxu0 0.0
  %612 = vmatprep.subr.mxu0 0.0
  %613 = vmatpush1.msra.mxu0 0.0
  %614 = vmatprep.subr.mxu0 0.0
  %615 = vmatpush1.msra.mxu0 0.0
  %616 = vmatprep.subr.mxu0 0.0
  %617 = vmatpush1.msra.mxu0 0.0
  %618 = vmatprep.subr.mxu0 0.0
  %619 = vmatpush1.msra.mxu0 0.0
  %620 = vmatprep.subr.mxu0 0.0
  %621 = vmatpush1.msra.mxu0 0.0
  %622 = vmatprep.subr.mxu0 0.0
  %623 = vmatpush1.msra.mxu0 0.0
  %624 = vmatprep.subr.mxu0 0.0
  %625 = vmatpush1.msra.mxu0 0.0
  %626 = vmatprep.mubr.f32.mxu0 0.0
  %627 = vmatmul.mubr.f32.gmra.mrb[0].mxu0 %v336
  %v628 = vpop.f32.mrb[0].mxu0
  %v629 = vadd.f32 %v544, %v628
  %v630 = vpop.f32.mrb[0].mxu0
  %631 = vmatprep.mubr.f32.mxu0 0.0
  %632 = vmatmul.mubr.f32.gmra.mrb[0].mxu0 %v341
  %v633 = vpop.f32.mrb[0].mxu0
  %v634 = vadd.f32 %v549, %v633
  %v635 = vpop.f32.mrb[0].mxu0
  %636 = vmatprep.mubr.f32.mxu0 0.0
  %637 = vmatmul.mubr.f32.gmra.mrb[0].mxu0 %v346
  %v638 = vpop.f32.mrb[0].mxu0
  %v639 = vadd.f32 %v554, %v638
  %v640 = vpop.f32.mrb[0].mxu0
  %641 = vmatprep.mubr.f32.mxu0 0.0
  %642 = vmatmul.mubr.f32.gmra.mrb[0].mxu0 %v351
  %v643 = vpop.f32.mrb[0].mxu0
  %v644 = vadd.f32 %v559, %v643
  %v645 = vpop.f32.mrb[0].mxu0
  %646 = vdwg.mxu0
  %s647 = scalar_lea.vmem %s3, 64
  %v648 = vld [vmem:[%s647] sm:$0xff]
  %v649 = vld [vmem:[%s647 + $0x8] sm:$0xff]
  %v650 = vld [vmem:[%s647 + $0x10] sm:$0xff]
  %v651 = vld [vmem:[%s647 + $0x18] sm:$0xff]
  %652 = vmatprep.subr.mxu0 0.0
  %653 = vmatpush1.msra.mxu0 %v249
  %654 = vmatprep.subr.mxu0 0.0
  %655 = vmatpush1.msra.mxu0 %v250
  %656 = vmatprep.subr.mxu0 0.0
  %657 = vmatpush1.msra.mxu0 %v251
  %658 = vmatprep.subr.mxu0 0.0
  %659 = vmatpush1.msra.mxu0 %v252
  %660 = vmatprep.subr.mxu0 0.0
  %661 = vmatpush1.msra.mxu0 %v253
  %662 = vmatprep.subr.mxu0 0.0
  %663 = vmatpush1.msra.mxu0 %v254
  %664 = vmatprep.subr.mxu0 0.0
  %665 = vmatpush1.msra.mxu0 %v255
  %666 = vmatprep.subr.mxu0 0.0
  %667 = vmatpush1.msra.mxu0 %v256
  %668 = vmatprep.subr.mxu0 0.0
  %669 = vmatpush1.msra.mxu0 %v257
  %670 = vmatprep.subr.mxu0 0.0
  %671 = vmatpush1.msra.mxu0 %v258
  %672 = vmatprep.subr.mxu0 0.0
  %673 = vmatpush1.msra.mxu0 %v259
  %674 = vmatprep.subr.mxu0 0.0
  %675 = vmatpush1.msra.mxu0 %v260
  %676 = vmatprep.subr.mxu0 0.0
  %677 = vmatpush1.msra.mxu0 %v261
  %678 = vmatprep.subr.mxu0 0.0
  %679 = vmatpush1.msra.mxu0 %v262
  %680 = vmatprep.subr.mxu0 0.0
  %681 = vmatpush1.msra.mxu0 %v263
  %682 = vmatprep.subr.mxu0 0.0
  %683 = vmatpush1.msra.mxu0 %v264
  %684 = vmatprep.subr.mxu0 0.0
  %685 = vmatpush1.msra.mxu0 0.0
  %686 = vmatprep.subr.mxu0 0.0
  %687 = vmatpush1.msra.mxu0 0.0
  %688 = vmatprep.subr.mxu0 0.0
  %689 = vmatpush1.msra.mxu0 0.0
  %690 = vmatprep.subr.mxu0 0.0
  %691 = vmatpush1.msra.mxu0 0.0
  %692 = vmatprep.subr.mxu0 0.0
  %693 = vmatpush1.msra.mxu0 0.0
  %694 = vmatprep.subr.mxu0 0.0
  %695 = vmatpush1.msra.mxu0 0.0
  %696 = vmatprep.subr.mxu0 0.0
  %697 = vmatpush1.msra.mxu0 0.0
  %698 = vmatprep.subr.mxu0 0.0
  %699 = vmatpush1.msra.mxu0 0.0
  %700 = vmatprep.subr.mxu0 0.0
  %701 = vmatpush1.msra.mxu0 0.0
  %702 = vmatprep.subr.mxu0 0.0
  %703 = vmatpush1.msra.mxu0 0.0
  %704 = vmatprep.subr.mxu0 0.0
  %705 = vmatpush1.msra.mxu0 0.0
  %706 = vmatprep.subr.mxu0 0.0
  %707 = vmatpush1.msra.mxu0 0.0
  %708 = vmatprep.subr.mxu0 0.0
  %709 = vmatpush1.msra.mxu0 0.0
  %710 = vmatprep.subr.mxu0 0.0
  %711 = vmatpush1.msra.mxu0 0.0
  %712 = vmatprep.subr.mxu0 0.0
  %713 = vmatpush1.msra.mxu0 0.0
  %714 = vmatprep.subr.mxu0 0.0
  %715 = vmatpush1.msra.mxu0 0.0
  %716 = vmatprep.mubr.f32.mxu0 0.0
  %717 = vmatmul.mubr.f32.gmra.mrb[0].mxu0 %v648
  %v718 = vpop.f32.mrb[0].mxu0
  %v719 = vadd.f32 0.0, %v718
  %v720 = vpop.f32.mrb[0].mxu0
  %721 = vmatprep.mubr.f32.mxu0 0.0
  %722 = vmatmul.mubr.f32.gmra.mrb[0].mxu0 %v649
  %v723 = vpop.f32.mrb[0].mxu0
  %v724 = vadd.f32 0.0, %v723
  %v725 = vpop.f32.mrb[0].mxu0
  %726 = vmatprep.mubr.f32.mxu0 0.0
  %727 = vmatmul.mubr.f32.gmra.mrb[0].mxu0 %v650
  %v728 = vpop.f32.mrb[0].mxu0
  %v729 = vadd.f32 0.0, %v728
  %v730 = vpop.f32.mrb[0].mxu0
  %731 = vmatprep.mubr.f32.mxu0 0.0
  %732 = vmatmul.mubr.f32.gmra.mrb[0].mxu0 %v651
  %v733 = vpop.f32.mrb[0].mxu0
  %v734 = vadd.f32 0.0, %v733
  %v735 = vpop.f32.mrb[0].mxu0
  %736 = vdwg.mxu0
  %s737 = scalar_lea.vmem %s4, 256
  %v738 = vld [vmem:[%s737] sm:$0xff]
  %v739 = vld [vmem:[%s737 + $0x8] sm:$0xff]
  %v740 = vld [vmem:[%s737 + $0x10] sm:$0xff]
  %v741 = vld [vmem:[%s737 + $0x18] sm:$0xff]
  %v742 = vld [vmem:[%s737 + $0x20] sm:$0xff]
  %v743 = vld [vmem:[%s737 + $0x28] sm:$0xff]
  %v744 = vld [vmem:[%s737 + $0x30] sm:$0xff]
  %v745 = vld [vmem:[%s737 + $0x38] sm:$0xff]
  %v746 = vld [vmem:[%s737 + $0x40] sm:$0xff]
  %v747 = vld [vmem:[%s737 + $0x48] sm:$0xff]
  %v748 = vld [vmem:[%s737 + $0x50] sm:$0xff]
  %v749 = vld [vmem:[%s737 + $0x58] sm:$0xff]
  %v750 = vld [vmem:[%s737 + $0x60] sm:$0xff]
  %v751 = vld [vmem:[%s737 + $0x68] sm:$0xff]
  %v752 = vld [vmem:[%s737 + $0x70] sm:$0xff]
  %v753 = vld [vmem:[%s737 + $0x78] sm:$0xff]
  %754 = vmatprep.subr.mxu0 0.0
  %755 = vmatpush1.msra.mxu0 %v738
  %756 = vmatprep.subr.mxu0 0.0
  %757 = vmatpush1.msra.mxu0 %v739
  %758 = vmatprep.subr.mxu0 0.0
  %759 = vmatpush1.msra.mxu0 %v740
  %760 = vmatprep.subr.mxu0 0.0
  %761 = vmatpush1.msra.mxu0 %v741
  %762 = vmatprep.subr.mxu0 0.0
  %763 = vmatpush1.msra.mxu0 %v742
  %764 = vmatprep.subr.mxu0 0.0
  %765 = vmatpush1.msra.mxu0 %v743
  %766 = vmatprep.subr.mxu0 0.0
  %767 = vmatpush1.msra.mxu0 %v744
  %768 = vmatprep.subr.mxu0 0.0
  %769 = vmatpush1.msra.mxu0 %v745
  %770 = vmatprep.subr.mxu0 0.0
  %771 = vmatpush1.msra.mxu0 %v746
  %772 = vmatprep.subr.mxu0 0.0
  %773 = vmatpush1.msra.mxu0 %v747
  %774 = vmatprep.subr.mxu0 0.0
  %775 = vmatpush1.msra.mxu0 %v748
  %776 = vmatprep.subr.mxu0 0.0
  %777 = vmatpush1.msra.mxu0 %v749
  %778 = vmatprep.subr.mxu0 0.0
  %779 = vmatpush1.msra.mxu0 %v750
  %780 = vmatprep.subr.mxu0 0.0
  %781 = vmatpush1.msra.mxu0 %v751
  %782 = vmatprep.subr.mxu0 0.0
  %783 = vmatpush1.msra.mxu0 %v752
  %784 = vmatprep.subr.mxu0 0.0
  %785 = vmatpush1.msra.mxu0 %v753
  %786 = vmatprep.subr.mxu0 0.0
  %787 = vmatpush1.msra.mxu0 0.0
  %788 = vmatprep.subr.mxu0 0.0
  %789 = vmatpush1.msra.mxu0 0.0
  %790 = vmatprep.subr.mxu0 0.0
  %791 = vmatpush1.msra.mxu0 0.0
  %792 = vmatprep.subr.mxu0 0.0
  %793 = vmatpush1.msra.mxu0 0.0
  %794 = vmatprep.subr.mxu0 0.0
  %795 = vmatpush1.msra.mxu0 0.0
  %796 = vmatprep.subr.mxu0 0.0
  %797 = vmatpush1.msra.mxu0 0.0
  %798 = vmatprep.subr.mxu0 0.0
  %799 = vmatpush1.msra.mxu0 0.0
  %800 = vmatprep.subr.mxu0 0.0
  %801 = vmatpush1.msra.mxu0 0.0
  %802 = vmatprep.subr.mxu0 0.0
  %803 = vmatpush1.msra.mxu0 0.0
  %804 = vmatprep.subr.mxu0 0.0
  %805 = vmatpush1.msra.mxu0 0.0
  %806 = vmatprep.subr.mxu0 0.0
  %807 = vmatpush1.msra.mxu0 0.0
  %808 = vmatprep.subr.mxu0 0.0
  %809 = vmatpush1.msra.mxu0 0.0
  %810 = vmatprep.subr.mxu0 0.0
  %811 = vmatpush1.msra.mxu0 0.0
  %812 = vmatprep.subr.mxu0 0.0
  %813 = vmatpush1.msra.mxu0 0.0
  %814 = vmatprep.subr.mxu0 0.0
  %815 = vmatpush1.msra.mxu0 0.0
  %816 = vmatprep.subr.mxu0 0.0
  %817 = vmatpush1.msra.mxu0 0.0
  %818 = vmatprep.mubr.f32.mxu0 0.0
  %819 = vmatmul.mubr.f32.gmra.mrb[0].mxu0 %v719
  %v820 = vpop.f32.mrb[0].mxu0
  %v821 = vadd.f32 0.0, %v820
  %v822 = vpop.f32.mrb[0].mxu0
  %823 = vmatprep.mubr.f32.mxu0 0.0
  %824 = vmatmul.mubr.f32.gmra.mrb[0].mxu0 %v724
  %v825 = vpop.f32.mrb[0].mxu0
  %v826 = vadd.f32 0.0, %v825
  %v827 = vpop.f32.mrb[0].mxu0
  %828 = vmatprep.mubr.f32.mxu0 0.0
  %829 = vmatmul.mubr.f32.gmra.mrb[0].mxu0 %v729
  %v830 = vpop.f32.mrb[0].mxu0
  %v831 = vadd.f32 0.0, %v830
  %v832 = vpop.f32.mrb[0].mxu0
  %833 = vmatprep.mubr.f32.mxu0 0.0
  %834 = vmatmul.mubr.f32.gmra.mrb[0].mxu0 %v734
  %v835 = vpop.f32.mrb[0].mxu0
  %v836 = vadd.f32 0.0, %v835
  %v837 = vpop.f32.mrb[0].mxu0
  %838 = vdwg.mxu0
  %v839 = vadd.f32 %v629, %v821
  %v840 = vadd.f32 %v634, %v826
  %v841 = vadd.f32 %v639, %v831
  %v842 = vadd.f32 %v644, %v836
  %s843 = scalar_lea.vmem %s3, 96
  %v844 = vld [vmem:[%s843] sm:$0xff]
  %v845 = vld [vmem:[%s843 + $0x8] sm:$0xff]
  %v846 = vld [vmem:[%s843 + $0x10] sm:$0xff]
  %v847 = vld [vmem:[%s843 + $0x18] sm:$0xff]
  %848 = vmatprep.subr.mxu0 0.0
  %849 = vmatpush1.msra.mxu0 %v249
  %850 = vmatprep.subr.mxu0 0.0
  %851 = vmatpush1.msra.mxu0 %v250
  %852 = vmatprep.subr.mxu0 0.0
  %853 = vmatpush1.msra.mxu0 %v251
  %854 = vmatprep.subr.mxu0 0.0
  %855 = vmatpush1.msra.mxu0 %v252
  %856 = vmatprep.subr.mxu0 0.0
  %857 = vmatpush1.msra.mxu0 %v253
  %858 = vmatprep.subr.mxu0 0.0
  %859 = vmatpush1.msra.mxu0 %v254
  %860 = vmatprep.subr.mxu0 0.0
  %861 = vmatpush1.msra.mxu0 %v255
  %862 = vmatprep.subr.mxu0 0.0
  %863 = vmatpush1.msra.mxu0 %v256
  %864 = vmatprep.subr.mxu0 0.0
  %865 = vmatpush1.msra.mxu0 %v257
  %866 = vmatprep.subr.mxu0 0.0
  %867 = vmatpush1.msra.mxu0 %v258
  %868 = vmatprep.subr.mxu0 0.0
  %869 = vmatpush1.msra.mxu0 %v259
  %870 = vmatprep.subr.mxu0 0.0
  %871 = vmatpush1.msra.mxu0 %v260
  %872 = vmatprep.subr.mxu0 0.0
  %873 = vmatpush1.msra.mxu0 %v261
  %874 = vmatprep.subr.mxu0 0.0
  %875 = vmatpush1.msra.mxu0 %v262
  %876 = vmatprep.subr.mxu0 0.0
  %877 = vmatpush1.msra.mxu0 %v263
  %878 = vmatprep.subr.mxu0 0.0
  %879 = vmatpush1.msra.mxu0 %v264
  %880 = vmatprep.subr.mxu0 0.0
  %881 = vmatpush1.msra.mxu0 0.0
  %882 = vmatprep.subr.mxu0 0.0
  %883 = vmatpush1.msra.mxu0 0.0
  %884 = vmatprep.subr.mxu0 0.0
  %885 = vmatpush1.msra.mxu0 0.0
  %886 = vmatprep.subr.mxu0 0.0
  %887 = vmatpush1.msra.mxu0 0.0
  %888 = vmatprep.subr.mxu0 0.0
  %889 = vmatpush1.msra.mxu0 0.0
  %890 = vmatprep.subr.mxu0 0.0
  %891 = vmatpush1.msra.mxu0 0.0
  %892 = vmatprep.subr.mxu0 0.0
  %893 = vmatpush1.msra.mxu0 0.0
  %894 = vmatprep.subr.mxu0 0.0
  %895 = vmatpush1.msra.mxu0 0.0
  %896 = vmatprep.subr.mxu0 0.0
  %897 = vmatpush1.msra.mxu0 0.0
  %898 = vmatprep.subr.mxu0 0.0
  %899 = vmatpush1.msra.mxu0 0.0
  %900 = vmatprep.subr.mxu0 0.0
  %901 = vmatpush1.msra.mxu0 0.0
  %902 = vmatprep.subr.mxu0 0.0
  %903 = vmatpush1.msra.mxu0 0.0
  %904 = vmatprep.subr.mxu0 0.0
  %905 = vmatpush1.msra.mxu0 0.0
  %906 = vmatprep.subr.mxu0 0.0
  %907 = vmatpush1.msra.mxu0 0.0
  %908 = vmatprep.subr.mxu0 0.0
  %909 = vmatpush1.msra.mxu0 0.0
  %910 = vmatprep.subr.mxu0 0.0
  %911 = vmatpush1.msra.mxu0 0.0
  %912 = vmatprep.mubr.f32.mxu0 0.0
  %913 = vmatmul.mubr.f32.gmra.mrb[0].mxu0 %v844
  %v914 = vpop.f32.mrb[0].mxu0
  %v915 = vadd.f32 0.0, %v914
  %v916 = vpop.f32.mrb[0].mxu0
  %917 = vmatprep.mubr.f32.mxu0 0.0
  %918 = vmatmul.mubr.f32.gmra.mrb[0].mxu0 %v845
  %v919 = vpop.f32.mrb[0].mxu0
  %v920 = vadd.f32 0.0, %v919
  %v921 = vpop.f32.mrb[0].mxu0
  %922 = vmatprep.mubr.f32.mxu0 0.0
  %923 = vmatmul.mubr.f32.gmra.mrb[0].mxu0 %v846
  %v924 = vpop.f32.mrb[0].mxu0
  %v925 = vadd.f32 0.0, %v924
  %v926 = vpop.f32.mrb[0].mxu0
  %927 = vmatprep.mubr.f32.mxu0 0.0
  %928 = vmatmul.mubr.f32.gmra.mrb[0].mxu0 %v847
  %v929 = vpop.f32.mrb[0].mxu0
  %v930 = vadd.f32 0.0, %v929
  %v931 = vpop.f32.mrb[0].mxu0
  %932 = vdwg.mxu0
  %s933 = scalar_lea.vmem %s4, 384
  %v934 = vld [vmem:[%s933] sm:$0xff]
  %v935 = vld [vmem:[%s933 + $0x8] sm:$0xff]
  %v936 = vld [vmem:[%s933 + $0x10] sm:$0xff]
  %v937 = vld [vmem:[%s933 + $0x18] sm:$0xff]
  %v938 = vld [vmem:[%s933 + $0x20] sm:$0xff]
  %v939 = vld [vmem:[%s933 + $0x28] sm:$0xff]
  %v940 = vld [vmem:[%s933 + $0x30] sm:$0xff]
  %v941 = vld [vmem:[%s933 + $0x38] sm:$0xff]
  %v942 = vld [vmem:[%s933 + $0x40] sm:$0xff]
  %v943 = vld [vmem:[%s933 + $0x48] sm:$0xff]
  %v944 = vld [vmem:[%s933 + $0x50] sm:$0xff]
  %v945 = vld [vmem:[%s933 + $0x58] sm:$0xff]
  %v946 = vld [vmem:[%s933 + $0x60] sm:$0xff]
  %v947 = vld [vmem:[%s933 + $0x68] sm:$0xff]
  %v948 = vld [vmem:[%s933 + $0x70] sm:$0xff]
  %v949 = vld [vmem:[%s933 + $0x78] sm:$0xff]
  %950 = vmatprep.subr.mxu0 0.0
  %951 = vmatpush1.msra.mxu0 %v934
  %952 = vmatprep.subr.mxu0 0.0
  %953 = vmatpush1.msra.mxu0 %v935
  %954 = vmatprep.subr.mxu0 0.0
  %955 = vmatpush1.msra.mxu0 %v936
  %956 = vmatprep.subr.mxu0 0.0
  %957 = vmatpush1.msra.mxu0 %v937
  %958 = vmatprep.subr.mxu0 0.0
  %959 = vmatpush1.msra.mxu0 %v938
  %960 = vmatprep.subr.mxu0 0.0
  %961 = vmatpush1.msra.mxu0 %v939
  %962 = vmatprep.subr.mxu0 0.0
  %963 = vmatpush1.msra.mxu0 %v940
  %964 = vmatprep.subr.mxu0 0.0
  %965 = vmatpush1.msra.mxu0 %v941
  %966 = vmatprep.subr.mxu0 0.0
  %967 = vmatpush1.msra.mxu0 %v942
  %968 = vmatprep.subr.mxu0 0.0
  %969 = vmatpush1.msra.mxu0 %v943
  %970 = vmatprep.subr.mxu0 0.0
  %971 = vmatpush1.msra.mxu0 %v944
  %972 = vmatprep.subr.mxu0 0.0
  %973 = vmatpush1.msra.mxu0 %v945
  %974 = vmatprep.subr.mxu0 0.0
  %975 = vmatpush1.msra.mxu0 %v946
  %976 = vmatprep.subr.mxu0 0.0
  %977 = vmatpush1.msra.mxu0 %v947
  %978 = vmatprep.subr.mxu0 0.0
  %979 = vmatpush1.msra.mxu0 %v948
  %980 = vmatprep.subr.mxu0 0.0
  %981 = vmatpush1.msra.mxu0 %v949
  %982 = vmatprep.subr.mxu0 0.0
  %983 = vmatpush1.msra.mxu0 0.0
  %984 = vmatprep.subr.mxu0 0.0
  %985 = vmatpush1.msra.mxu0 0.0
  %986 = vmatprep.subr.mxu0 0.0
  %987 = vmatpush1.msra.mxu0 0.0
  %988 = vmatprep.subr.mxu0 0.0
  %989 = vmatpush1.msra.mxu0 0.0
  %990 = vmatprep.subr.mxu0 0.0
  %991 = vmatpush1.msra.mxu0 0.0
  %992 = vmatprep.subr.mxu0 0.0
  %993 = vmatpush1.msra.mxu0 0.0
  %994 = vmatprep.subr.mxu0 0.0
  %995 = vmatpush1.msra.mxu0 0.0
  %996 = vmatprep.subr.mxu0 0.0
  %997 = vmatpush1.msra.mxu0 0.0
  %998 = vmatprep.subr.mxu0 0.0
  %999 = vmatpush1.msra.mxu0 0.0
  %1000 = vmatprep.subr.mxu0 0.0
  %1001 = vmatpush1.msra.mxu0 0.0
  %1002 = vmatprep.subr.mxu0 0.0
  %1003 = vmatpush1.msra.mxu0 0.0
  %1004 = vmatprep.subr.mxu0 0.0
  %1005 = vmatpush1.msra.mxu0 0.0
  %1006 = vmatprep.subr.mxu0 0.0
  %1007 = vmatpush1.msra.mxu0 0.0
  %1008 = vmatprep.subr.mxu0 0.0
  %1009 = vmatpush1.msra.mxu0 0.0
  %1010 = vmatprep.subr.mxu0 0.0
  %1011 = vmatpush1.msra.mxu0 0.0
  %1012 = vmatprep.subr.mxu0 0.0
  %1013 = vmatpush1.msra.mxu0 0.0
  %1014 = vmatprep.mubr.f32.mxu0 0.0
  %1015 = vmatmul.mubr.f32.gmra.mrb[0].mxu0 %v915
  %v1016 = vpop.f32.mrb[0].mxu0
  %v1017 = vadd.f32 0.0, %v1016
  %v1018 = vpop.f32.mrb[0].mxu0
  %1019 = vmatprep.mubr.f32.mxu0 0.0
  %1020 = vmatmul.mubr.f32.gmra.mrb[0].mxu0 %v920
  %v1021 = vpop.f32.mrb[0].mxu0
  %v1022 = vadd.f32 0.0, %v1021
  %v1023 = vpop.f32.mrb[0].mxu0
  %1024 = vmatprep.mubr.f32.mxu0 0.0
  %1025 = vmatmul.mubr.f32.gmra.mrb[0].mxu0 %v925
  %v1026 = vpop.f32.mrb[0].mxu0
  %v1027 = vadd.f32 0.0, %v1026
  %v1028 = vpop.f32.mrb[0].mxu0
  %1029 = vmatprep.mubr.f32.mxu0 0.0
  %1030 = vmatmul.mubr.f32.gmra.mrb[0].mxu0 %v930
  %v1031 = vpop.f32.mrb[0].mxu0
  %v1032 = vadd.f32 0.0, %v1031
  %v1033 = vpop.f32.mrb[0].mxu0
  %1034 = vdwg.mxu0
  %v1035 = vadd.f32 %v839, %v1017
  %v1036 = vadd.f32 %v840, %v1022
  %v1037 = vadd.f32 %v841, %v1027
  %v1038 = vadd.f32 %v842, %v1032
  %s1039 = scalar_lea.vmem %s3, 128
  %v1040 = vld [vmem:[%s1039] sm:$0xff]
  %v1041 = vld [vmem:[%s1039 + $0x8] sm:$0xff]
  %v1042 = vld [vmem:[%s1039 + $0x10] sm:$0xff]
  %v1043 = vld [vmem:[%s1039 + $0x18] sm:$0xff]
  %1044 = vmatprep.subr.mxu0 0.0
  %1045 = vmatpush1.msra.mxu0 %v249
  %1046 = vmatprep.subr.mxu0 0.0
  %1047 = vmatpush1.msra.mxu0 %v250
  %1048 = vmatprep.subr.mxu0 0.0
  %1049 = vmatpush1.msra.mxu0 %v251
  %1050 = vmatprep.subr.mxu0 0.0
  %1051 = vmatpush1.msra.mxu0 %v252
  %1052 = vmatprep.subr.mxu0 0.0
  %1053 = vmatpush1.msra.mxu0 %v253
  %1054 = vmatprep.subr.mxu0 0.0
  %1055 = vmatpush1.msra.mxu0 %v254
  %1056 = vmatprep.subr.mxu0 0.0
  %1057 = vmatpush1.msra.mxu0 %v255
  %1058 = vmatprep.subr.mxu0 0.0
  %1059 = vmatpush1.msra.mxu0 %v256
  %1060 = vmatprep.subr.mxu0 0.0
  %1061 = vmatpush1.msra.mxu0 %v257
  %1062 = vmatprep.subr.mxu0 0.0
  %1063 = vmatpush1.msra.mxu0 %v258
  %1064 = vmatprep.subr.mxu0 0.0
  %1065 = vmatpush1.msra.mxu0 %v259
  %1066 = vmatprep.subr.mxu0 0.0
  %1067 = vmatpush1.msra.mxu0 %v260
  %1068 = vmatprep.subr.mxu0 0.0
  %1069 = vmatpush1.msra.mxu0 %v261
  %1070 = vmatprep.subr.mxu0 0.0
  %1071 = vmatpush1.msra.mxu0 %v262
  %1072 = vmatprep.subr.mxu0 0.0
  %1073 = vmatpush1.msra.mxu0 %v263
  %1074 = vmatprep.subr.mxu0 0.0
  %1075 = vmatpush1.msra.mxu0 %v264
  %1076 = vmatprep.subr.mxu0 0.0
  %1077 = vmatpush1.msra.mxu0 0.0
  %1078 = vmatprep.subr.mxu0 0.0
  %1079 = vmatpush1.msra.mxu0 0.0
  %1080 = vmatprep.subr.mxu0 0.0
  %1081 = vmatpush1.msra.mxu0 0.0
  %1082 = vmatprep.subr.mxu0 0.0
  %1083 = vmatpush1.msra.mxu0 0.0
  %1084 = vmatprep.subr.mxu0 0.0
  %1085 = vmatpush1.msra.mxu0 0.0
  %1086 = vmatprep.subr.mxu0 0.0
  %1087 = vmatpush1.msra.mxu0 0.0
  %1088 = vmatprep.subr.mxu0 0.0
  %1089 = vmatpush1.msra.mxu0 0.0
  %1090 = vmatprep.subr.mxu0 0.0
  %1091 = vmatpush1.msra.mxu0 0.0
  %1092 = vmatprep.subr.mxu0 0.0
  %1093 = vmatpush1.msra.mxu0 0.0
  %1094 = vmatprep.subr.mxu0 0.0
  %1095 = vmatpush1.msra.mxu0 0.0
  %1096 = vmatprep.subr.mxu0 0.0
  %1097 = vmatpush1.msra.mxu0 0.0
  %1098 = vmatprep.subr.mxu0 0.0
  %1099 = vmatpush1.msra.mxu0 0.0
  %1100 = vmatprep.subr.mxu0 0.0
  %1101 = vmatpush1.msra.mxu0 0.0
  %1102 = vmatprep.subr.mxu0 0.0
  %1103 = vmatpush1.msra.mxu0 0.0
  %1104 = vmatprep.subr.mxu0 0.0
  %1105 = vmatpush1.msra.mxu0 0.0
  %1106 = vmatprep.subr.mxu0 0.0
  %1107 = vmatpush1.msra.mxu0 0.0
  %1108 = vmatprep.mubr.f32.mxu0 0.0
  %1109 = vmatmul.mubr.f32.gmra.mrb[0].mxu0 %v1040
  %v1110 = vpop.f32.mrb[0].mxu0
  %v1111 = vadd.f32 0.0, %v1110
  %v1112 = vpop.f32.mrb[0].mxu0
  %1113 = vmatprep.mubr.f32.mxu0 0.0
  %1114 = vmatmul.mubr.f32.gmra.mrb[0].mxu0 %v1041
  %v1115 = vpop.f32.mrb[0].mxu0
  %v1116 = vadd.f32 0.0, %v1115
  %v1117 = vpop.f32.mrb[0].mxu0
  %1118 = vmatprep.mubr.f32.mxu0 0.0
  %1119 = vmatmul.mubr.f32.gmra.mrb[0].mxu0 %v1042
  %v1120 = vpop.f32.mrb[0].mxu0
  %v1121 = vadd.f32 0.0, %v1120
  %v1122 = vpop.f32.mrb[0].mxu0
  %1123 = vmatprep.mubr.f32.mxu0 0.0
  %1124 = vmatmul.mubr.f32.gmra.mrb[0].mxu0 %v1043
  %v1125 = vpop.f32.mrb[0].mxu0
  %v1126 = vadd.f32 0.0, %v1125
  %v1127 = vpop.f32.mrb[0].mxu0
  %1128 = vdwg.mxu0
  %s1129 = scalar_lea.vmem %s4, 512
  %v1130 = vld [vmem:[%s1129] sm:$0xff]
  %v1131 = vld [vmem:[%s1129 + $0x8] sm:$0xff]
  %v1132 = vld [vmem:[%s1129 + $0x10] sm:$0xff]
  %v1133 = vld [vmem:[%s1129 + $0x18] sm:$0xff]
  %v1134 = vld [vmem:[%s1129 + $0x20] sm:$0xff]
  %v1135 = vld [vmem:[%s1129 + $0x28] sm:$0xff]
  %v1136 = vld [vmem:[%s1129 + $0x30] sm:$0xff]
  %v1137 = vld [vmem:[%s1129 + $0x38] sm:$0xff]
  %v1138 = vld [vmem:[%s1129 + $0x40] sm:$0xff]
  %v1139 = vld [vmem:[%s1129 + $0x48] sm:$0xff]
  %v1140 = vld [vmem:[%s1129 + $0x50] sm:$0xff]
  %v1141 = vld [vmem:[%s1129 + $0x58] sm:$0xff]
  %v1142 = vld [vmem:[%s1129 + $0x60] sm:$0xff]
  %v1143 = vld [vmem:[%s1129 + $0x68] sm:$0xff]
  %v1144 = vld [vmem:[%s1129 + $0x70] sm:$0xff]
  %v1145 = vld [vmem:[%s1129 + $0x78] sm:$0xff]
  %1146 = vmatprep.subr.mxu0 0.0
  %1147 = vmatpush1.msra.mxu0 %v1130
  %1148 = vmatprep.subr.mxu0 0.0
  %1149 = vmatpush1.msra.mxu0 %v1131
  %1150 = vmatprep.subr.mxu0 0.0
  %1151 = vmatpush1.msra.mxu0 %v1132
  %1152 = vmatprep.subr.mxu0 0.0
  %1153 = vmatpush1.msra.mxu0 %v1133
  %1154 = vmatprep.subr.mxu0 0.0
  %1155 = vmatpush1.msra.mxu0 %v1134
  %1156 = vmatprep.subr.mxu0 0.0
  %1157 = vmatpush1.msra.mxu0 %v1135
  %1158 = vmatprep.subr.mxu0 0.0
  %1159 = vmatpush1.msra.mxu0 %v1136
  %1160 = vmatprep.subr.mxu0 0.0
  %1161 = vmatpush1.msra.mxu0 %v1137
  %1162 = vmatprep.subr.mxu0 0.0
  %1163 = vmatpush1.msra.mxu0 %v1138
  %1164 = vmatprep.subr.mxu0 0.0
  %1165 = vmatpush1.msra.mxu0 %v1139
  %1166 = vmatprep.subr.mxu0 0.0
  %1167 = vmatpush1.msra.mxu0 %v1140
  %1168 = vmatprep.subr.mxu0 0.0
  %1169 = vmatpush1.msra.mxu0 %v1141
  %1170 = vmatprep.subr.mxu0 0.0
  %1171 = vmatpush1.msra.mxu0 %v1142
  %1172 = vmatprep.subr.mxu0 0.0
  %1173 = vmatpush1.msra.mxu0 %v1143
  %1174 = vmatprep.subr.mxu0 0.0
  %1175 = vmatpush1.msra.mxu0 %v1144
  %1176 = vmatprep.subr.mxu0 0.0
  %1177 = vmatpush1.msra.mxu0 %v1145
  %1178 = vmatprep.subr.mxu0 0.0
  %1179 = vmatpush1.msra.mxu0 0.0
  %1180 = vmatprep.subr.mxu0 0.0
  %1181 = vmatpush1.msra.mxu0 0.0
  %1182 = vmatprep.subr.mxu0 0.0
  %1183 = vmatpush1.msra.mxu0 0.0
  %1184 = vmatprep.subr.mxu0 0.0
  %1185 = vmatpush1.msra.mxu0 0.0
  %1186 = vmatprep.subr.mxu0 0.0
  %1187 = vmatpush1.msra.mxu0 0.0
  %1188 = vmatprep.subr.mxu0 0.0
  %1189 = vmatpush1.msra.mxu0 0.0
  %1190 = vmatprep.subr.mxu0 0.0
  %1191 = vmatpush1.msra.mxu0 0.0
  %1192 = vmatprep.subr.mxu0 0.0
  %1193 = vmatpush1.msra.mxu0 0.0
  %1194 = vmatprep.subr.mxu0 0.0
  %1195 = vmatpush1.msra.mxu0 0.0
  %1196 = vmatprep.subr.mxu0 0.0
  %1197 = vmatpush1.msra.mxu0 0.0
  %1198 = vmatprep.subr.mxu0 0.0
  %1199 = vmatpush1.msra.mxu0 0.0
  %1200 = vmatprep.subr.mxu0 0.0
  %1201 = vmatpush1.msra.mxu0 0.0
  %1202 = vmatprep.subr.mxu0 0.0
  %1203 = vmatpush1.msra.mxu0 0.0
  %1204 = vmatprep.subr.mxu0 0.0
  %1205 = vmatpush1.msra.mxu0 0.0
  %1206 = vmatprep.subr.mxu0 0.0
  %1207 = vmatpush1.msra.mxu0 0.0
  %1208 = vmatprep.subr.mxu0 0.0
  %1209 = vmatpush1.msra.mxu0 0.0
  %1210 = vmatprep.mubr.f32.mxu0 0.0
  %1211 = vmatmul.mubr.f32.gmra.mrb[0].mxu0 %v1111
  %v1212 = vpop.f32.mrb[0].mxu0
  %v1213 = vadd.f32 0.0, %v1212
  %v1214 = vpop.f32.mrb[0].mxu0
  %1215 = vmatprep.mubr.f32.mxu0 0.0
  %1216 = vmatmul.mubr.f32.gmra.mrb[0].mxu0 %v1116
  %v1217 = vpop.f32.mrb[0].mxu0
  %v1218 = vadd.f32 0.0, %v1217
  %v1219 = vpop.f32.mrb[0].mxu0
  %1220 = vmatprep.mubr.f32.mxu0 0.0
  %1221 = vmatmul.mubr.f32.gmra.mrb[0].mxu0 %v1121
  %v1222 = vpop.f32.mrb[0].mxu0
  %v1223 = vadd.f32 0.0, %v1222
  %v1224 = vpop.f32.mrb[0].mxu0
  %1225 = vmatprep.mubr.f32.mxu0 0.0
  %1226 = vmatmul.mubr.f32.gmra.mrb[0].mxu0 %v1126
  %v1227 = vpop.f32.mrb[0].mxu0
  %v1228 = vadd.f32 0.0, %v1227
  %v1229 = vpop.f32.mrb[0].mxu0
  %1230 = vdwg.mxu0
  %v1231 = vadd.f32 %v1035, %v1213
  %v1232 = vadd.f32 %v1036, %v1218
  %v1233 = vadd.f32 %v1037, %v1223
  %v1234 = vadd.f32 %v1038, %v1228
  %s1235 = scalar_lea.vmem %s3, 160
  %v1236 = vld [vmem:[%s1235] sm:$0xff]
  %v1237 = vld [vmem:[%s1235 + $0x8] sm:$0xff]
  %v1238 = vld [vmem:[%s1235 + $0x10] sm:$0xff]
  %v1239 = vld [vmem:[%s1235 + $0x18] sm:$0xff]
  %1240 = vmatprep.subr.mxu0 0.0
  %1241 = vmatpush1.msra.mxu0 %v249
  %1242 = vmatprep.subr.mxu0 0.0
  %1243 = vmatpush1.msra.mxu0 %v250
  %1244 = vmatprep.subr.mxu0 0.0
  %1245 = vmatpush1.msra.mxu0 %v251
  %1246 = vmatprep.subr.mxu0 0.0
  %1247 = vmatpush1.msra.mxu0 %v252
  %1248 = vmatprep.subr.mxu0 0.0
  %1249 = vmatpush1.msra.mxu0 %v253
  %1250 = vmatprep.subr.mxu0 0.0
  %1251 = vmatpush1.msra.mxu0 %v254
  %1252 = vmatprep.subr.mxu0 0.0
  %1253 = vmatpush1.msra.mxu0 %v255
  %1254 = vmatprep.subr.mxu0 0.0
  %1255 = vmatpush1.msra.mxu0 %v256
  %1256 = vmatprep.subr.mxu0 0.0
  %1257 = vmatpush1.msra.mxu0 %v257
  %1258 = vmatprep.subr.mxu0 0.0
  %1259 = vmatpush1.msra.mxu0 %v258
  %1260 = vmatprep.subr.mxu0 0.0
  %1261 = vmatpush1.msra.mxu0 %v259
  %1262 = vmatprep.subr.mxu0 0.0
  %1263 = vmatpush1.msra.mxu0 %v260
  %1264 = vmatprep.subr.mxu0 0.0
  %1265 = vmatpush1.msra.mxu0 %v261
  %1266 = vmatprep.subr.mxu0 0.0
  %1267 = vmatpush1.msra.mxu0 %v262
  %1268 = vmatprep.subr.mxu0 0.0
  %1269 = vmatpush1.msra.mxu0 %v263
  %1270 = vmatprep.subr.mxu0 0.0
  %1271 = vmatpush1.msra.mxu0 %v264
  %1272 = vmatprep.subr.mxu0 0.0
  %1273 = vmatpush1.msra.mxu0 0.0
  %1274 = vmatprep.subr.mxu0 0.0
  %1275 = vmatpush1.msra.mxu0 0.0
  %1276 = vmatprep.subr.mxu0 0.0
  %1277 = vmatpush1.msra.mxu0 0.0
  %1278 = vmatprep.subr.mxu0 0.0
  %1279 = vmatpush1.msra.mxu0 0.0
  %1280 = vmatprep.subr.mxu0 0.0
  %1281 = vmatpush1.msra.mxu0 0.0
  %1282 = vmatprep.subr.mxu0 0.0
  %1283 = vmatpush1.msra.mxu0 0.0
  %1284 = vmatprep.subr.mxu0 0.0
  %1285 = vmatpush1.msra.mxu0 0.0
  %1286 = vmatprep.subr.mxu0 0.0
  %1287 = vmatpush1.msra.mxu0 0.0
  %1288 = vmatprep.subr.mxu0 0.0
  %1289 = vmatpush1.msra.mxu0 0.0
  %1290 = vmatprep.subr.mxu0 0.0
  %1291 = vmatpush1.msra.mxu0 0.0
  %1292 = vmatprep.subr.mxu0 0.0
  %1293 = vmatpush1.msra.mxu0 0.0
  %1294 = vmatprep.subr.mxu0 0.0
  %1295 = vmatpush1.msra.mxu0 0.0
  %1296 = vmatprep.subr.mxu0 0.0
  %1297 = vmatpush1.msra.mxu0 0.0
  %1298 = vmatprep.subr.mxu0 0.0
  %1299 = vmatpush1.msra.mxu0 0.0
  %1300 = vmatprep.subr.mxu0 0.0
  %1301 = vmatpush1.msra.mxu0 0.0
  %1302 = vmatprep.subr.mxu0 0.0
  %1303 = vmatpush1.msra.mxu0 0.0
  %1304 = vmatprep.mubr.f32.mxu0 0.0
  %1305 = vmatmul.mubr.f32.gmra.mrb[0].mxu0 %v1236
  %v1306 = vpop.f32.mrb[0].mxu0
  %v1307 = vadd.f32 0.0, %v1306
  %v1308 = vpop.f32.mrb[0].mxu0
  %1309 = vmatprep.mubr.f32.mxu0 0.0
  %1310 = vmatmul.mubr.f32.gmra.mrb[0].mxu0 %v1237
  %v1311 = vpop.f32.mrb[0].mxu0
  %v1312 = vadd.f32 0.0, %v1311
  %v1313 = vpop.f32.mrb[0].mxu0
  %1314 = vmatprep.mubr.f32.mxu0 0.0
  %1315 = vmatmul.mubr.f32.gmra.mrb[0].mxu0 %v1238
  %v1316 = vpop.f32.mrb[0].mxu0
  %v1317 = vadd.f32 0.0, %v1316
  %v1318 = vpop.f32.mrb[0].mxu0
  %1319 = vmatprep.mubr.f32.mxu0 0.0
  %1320 = vmatmul.mubr.f32.gmra.mrb[0].mxu0 %v1239
  %v1321 = vpop.f32.mrb[0].mxu0
  %v1322 = vadd.f32 0.0, %v1321
  %v1323 = vpop.f32.mrb[0].mxu0
  %1324 = vdwg.mxu0
  %s1325 = scalar_lea.vmem %s4, 640
  %v1326 = vld [vmem:[%s1325] sm:$0xff]
  %v1327 = vld [vmem:[%s1325 + $0x8] sm:$0xff]
  %v1328 = vld [vmem:[%s1325 + $0x10] sm:$0xff]
  %v1329 = vld [vmem:[%s1325 + $0x18] sm:$0xff]
  %v1330 = vld [vmem:[%s1325 + $0x20] sm:$0xff]
  %v1331 = vld [vmem:[%s1325 + $0x28] sm:$0xff]
  %v1332 = vld [vmem:[%s1325 + $0x30] sm:$0xff]
  %v1333 = vld [vmem:[%s1325 + $0x38] sm:$0xff]
  %v1334 = vld [vmem:[%s1325 + $0x40] sm:$0xff]
  %v1335 = vld [vmem:[%s1325 + $0x48] sm:$0xff]
  %v1336 = vld [vmem:[%s1325 + $0x50] sm:$0xff]
  %v1337 = vld [vmem:[%s1325 + $0x58] sm:$0xff]
  %v1338 = vld [vmem:[%s1325 + $0x60] sm:$0xff]
  %v1339 = vld [vmem:[%s1325 + $0x68] sm:$0xff]
  %v1340 = vld [vmem:[%s1325 + $0x70] sm:$0xff]
  %v1341 = vld [vmem:[%s1325 + $0x78] sm:$0xff]
  %1342 = vmatprep.subr.mxu0 0.0
  %1343 = vmatpush1.msra.mxu0 %v1326
  %1344 = vmatprep.subr.mxu0 0.0
  %1345 = vmatpush1.msra.mxu0 %v1327
  %1346 = vmatprep.subr.mxu0 0.0
  %1347 = vmatpush1.msra.mxu0 %v1328
  %1348 = vmatprep.subr.mxu0 0.0
  %1349 = vmatpush1.msra.mxu0 %v1329
  %1350 = vmatprep.subr.mxu0 0.0
  %1351 = vmatpush1.msra.mxu0 %v1330
  %1352 = vmatprep.subr.mxu0 0.0
  %1353 = vmatpush1.msra.mxu0 %v1331
  %1354 = vmatprep.subr.mxu0 0.0
  %1355 = vmatpush1.msra.mxu0 %v1332
  %1356 = vmatprep.subr.mxu0 0.0
  %1357 = vmatpush1.msra.mxu0 %v1333
  %1358 = vmatprep.subr.mxu0 0.0
  %1359 = vmatpush1.msra.mxu0 %v1334
  %1360 = vmatprep.subr.mxu0 0.0
  %1361 = vmatpush1.msra.mxu0 %v1335
  %1362 = vmatprep.subr.mxu0 0.0
  %1363 = vmatpush1.msra.mxu0 %v1336
  %1364 = vmatprep.subr.mxu0 0.0
  %1365 = vmatpush1.msra.mxu0 %v1337
  %1366 = vmatprep.subr.mxu0 0.0
  %1367 = vmatpush1.msra.mxu0 %v1338
  %1368 = vmatprep.subr.mxu0 0.0
  %1369 = vmatpush1.msra.mxu0 %v1339
  %1370 = vmatprep.subr.mxu0 0.0
  %1371 = vmatpush1.msra.mxu0 %v1340
  %1372 = vmatprep.subr.mxu0 0.0
  %1373 = vmatpush1.msra.mxu0 %v1341
  %1374 = vmatprep.subr.mxu0 0.0
  %1375 = vmatpush1.msra.mxu0 0.0
  %1376 = vmatprep.subr.mxu0 0.0
  %1377 = vmatpush1.msra.mxu0 0.0
  %1378 = vmatprep.subr.mxu0 0.0
  %1379 = vmatpush1.msra.mxu0 0.0
  %1380 = vmatprep.subr.mxu0 0.0
  %1381 = vmatpush1.msra.mxu0 0.0
  %1382 = vmatprep.subr.mxu0 0.0
  %1383 = vmatpush1.msra.mxu0 0.0
  %1384 = vmatprep.subr.mxu0 0.0
  %1385 = vmatpush1.msra.mxu0 0.0
  %1386 = vmatprep.subr.mxu0 0.0
  %1387 = vmatpush1.msra.mxu0 0.0
  %1388 = vmatprep.subr.mxu0 0.0
  %1389 = vmatpush1.msra.mxu0 0.0
  %1390 = vmatprep.subr.mxu0 0.0
  %1391 = vmatpush1.msra.mxu0 0.0
  %1392 = vmatprep.subr.mxu0 0.0
  %1393 = vmatpush1.msra.mxu0 0.0
  %1394 = vmatprep.subr.mxu0 0.0
  %1395 = vmatpush1.msra.mxu0 0.0
  %1396 = vmatprep.subr.mxu0 0.0
  %1397 = vmatpush1.msra.mxu0 0.0
  %1398 = vmatprep.subr.mxu0 0.0
  %1399 = vmatpush1.msra.mxu0 0.0
  %1400 = vmatprep.subr.mxu0 0.0
  %1401 = vmatpush1.msra.mxu0 0.0
  %1402 = vmatprep.subr.mxu0 0.0
  %1403 = vmatpush1.msra.mxu0 0.0
  %1404 = vmatprep.subr.mxu0 0.0
  %1405 = vmatpush1.msra.mxu0 0.0
  %1406 = vmatprep.mubr.f32.mxu0 0.0
  %1407 = vmatmul.mubr.f32.gmra.mrb[0].mxu0 %v1307
  %v1408 = vpop.f32.mrb[0].mxu0
  %v1409 = vadd.f32 0.0, %v1408
  %v1410 = vpop.f32.mrb[0].mxu0
  %1411 = vmatprep.mubr.f32.mxu0 0.0
  %1412 = vmatmul.mubr.f32.gmra.mrb[0].mxu0 %v1312
  %v1413 = vpop.f32.mrb[0].mxu0
  %v1414 = vadd.f32 0.0, %v1413
  %v1415 = vpop.f32.mrb[0].mxu0
  %1416 = vmatprep.mubr.f32.mxu0 0.0
  %1417 = vmatmul.mubr.f32.gmra.mrb[0].mxu0 %v1317
  %v1418 = vpop.f32.mrb[0].mxu0
  %v1419 = vadd.f32 0.0, %v1418
  %v1420 = vpop.f32.mrb[0].mxu0
  %1421 = vmatprep.mubr.f32.mxu0 0.0
  %1422 = vmatmul.mubr.f32.gmra.mrb[0].mxu0 %v1322
  %v1423 = vpop.f32.mrb[0].mxu0
  %v1424 = vadd.f32 0.0, %v1423
  %v1425 = vpop.f32.mrb[0].mxu0
  %1426 = vdwg.mxu0
  %v1427 = vadd.f32 %v1231, %v1409
  %v1428 = vadd.f32 %v1232, %v1414
  %v1429 = vadd.f32 %v1233, %v1419
  %v1430 = vadd.f32 %v1234, %v1424
  %s1431 = scalar_lea.vmem %s3, 192
  %v1432 = vld [vmem:[%s1431] sm:$0xff]
  %v1433 = vld [vmem:[%s1431 + $0x8] sm:$0xff]
  %v1434 = vld [vmem:[%s1431 + $0x10] sm:$0xff]
  %v1435 = vld [vmem:[%s1431 + $0x18] sm:$0xff]
  %1436 = vmatprep.subr.mxu0 0.0
  %1437 = vmatpush1.msra.mxu0 %v249
  %1438 = vmatprep.subr.mxu0 0.0
  %1439 = vmatpush1.msra.mxu0 %v250
  %1440 = vmatprep.subr.mxu0 0.0
  %1441 = vmatpush1.msra.mxu0 %v251
  %1442 = vmatprep.subr.mxu0 0.0
  %1443 = vmatpush1.msra.mxu0 %v252
  %1444 = vmatprep.subr.mxu0 0.0
  %1445 = vmatpush1.msra.mxu0 %v253
  %1446 = vmatprep.subr.mxu0 0.0
  %1447 = vmatpush1.msra.mxu0 %v254
  %1448 = vmatprep.subr.mxu0 0.0
  %1449 = vmatpush1.msra.mxu0 %v255
  %1450 = vmatprep.subr.mxu0 0.0
  %1451 = vmatpush1.msra.mxu0 %v256
  %1452 = vmatprep.subr.mxu0 0.0
  %1453 = vmatpush1.msra.mxu0 %v257
  %1454 = vmatprep.subr.mxu0 0.0
  %1455 = vmatpush1.msra.mxu0 %v258
  %1456 = vmatprep.subr.mxu0 0.0
  %1457 = vmatpush1.msra.mxu0 %v259
  %1458 = vmatprep.subr.mxu0 0.0
  %1459 = vmatpush1.msra.mxu0 %v260
  %1460 = vmatprep.subr.mxu0 0.0
  %1461 = vmatpush1.msra.mxu0 %v261
  %1462 = vmatprep.subr.mxu0 0.0
  %1463 = vmatpush1.msra.mxu0 %v262
  %1464 = vmatprep.subr.mxu0 0.0
  %1465 = vmatpush1.msra.mxu0 %v263
  %1466 = vmatprep.subr.mxu0 0.0
  %1467 = vmatpush1.msra.mxu0 %v264
  %1468 = vmatprep.subr.mxu0 0.0
  %1469 = vmatpush1.msra.mxu0 0.0
  %1470 = vmatprep.subr.mxu0 0.0
  %1471 = vmatpush1.msra.mxu0 0.0
  %1472 = vmatprep.subr.mxu0 0.0
  %1473 = vmatpush1.msra.mxu0 0.0
  %1474 = vmatprep.subr.mxu0 0.0
  %1475 = vmatpush1.msra.mxu0 0.0
  %1476 = vmatprep.subr.mxu0 0.0
  %1477 = vmatpush1.msra.mxu0 0.0
  %1478 = vmatprep.subr.mxu0 0.0
  %1479 = vmatpush1.msra.mxu0 0.0
  %1480 = vmatprep.subr.mxu0 0.0
  %1481 = vmatpush1.msra.mxu0 0.0
  %1482 = vmatprep.subr.mxu0 0.0
  %1483 = vmatpush1.msra.mxu0 0.0
  %1484 = vmatprep.subr.mxu0 0.0
  %1485 = vmatpush1.msra.mxu0 0.0
  %1486 = vmatprep.subr.mxu0 0.0
  %1487 = vmatpush1.msra.mxu0 0.0
  %1488 = vmatprep.subr.mxu0 0.0
  %1489 = vmatpush1.msra.mxu0 0.0
  %1490 = vmatprep.subr.mxu0 0.0
  %1491 = vmatpush1.msra.mxu0 0.0
  %1492 = vmatprep.subr.mxu0 0.0
  %1493 = vmatpush1.msra.mxu0 0.0
  %1494 = vmatprep.subr.mxu0 0.0
  %1495 = vmatpush1.msra.mxu0 0.0
  %1496 = vmatprep.subr.mxu0 0.0
  %1497 = vmatpush1.msra.mxu0 0.0
  %1498 = vmatprep.subr.mxu0 0.0
  %1499 = vmatpush1.msra.mxu0 0.0
  %1500 = vmatprep.mubr.f32.mxu0 0.0
  %1501 = vmatmul.mubr.f32.gmra.mrb[0].mxu0 %v1432
  %v1502 = vpop.f32.mrb[0].mxu0
  %v1503 = vadd.f32 0.0, %v1502
  %v1504 = vpop.f32.mrb[0].mxu0
  %1505 = vmatprep.mubr.f32.mxu0 0.0
  %1506 = vmatmul.mubr.f32.gmra.mrb[0].mxu0 %v1433
  %v1507 = vpop.f32.mrb[0].mxu0
  %v1508 = vadd.f32 0.0, %v1507
  %v1509 = vpop.f32.mrb[0].mxu0
  %1510 = vmatprep.mubr.f32.mxu0 0.0
  %1511 = vmatmul.mubr.f32.gmra.mrb[0].mxu0 %v1434
  %v1512 = vpop.f32.mrb[0].mxu0
  %v1513 = vadd.f32 0.0, %v1512
  %v1514 = vpop.f32.mrb[0].mxu0
  %1515 = vmatprep.mubr.f32.mxu0 0.0
  %1516 = vmatmul.mubr.f32.gmra.mrb[0].mxu0 %v1435
  %v1517 = vpop.f32.mrb[0].mxu0
  %v1518 = vadd.f32 0.0, %v1517
  %v1519 = vpop.f32.mrb[0].mxu0
  %1520 = vdwg.mxu0
  %s1521 = scalar_lea.vmem %s4, 768
  %v1522 = vld [vmem:[%s1521] sm:$0xff]
  %v1523 = vld [vmem:[%s1521 + $0x8] sm:$0xff]
  %v1524 = vld [vmem:[%s1521 + $0x10] sm:$0xff]
  %v1525 = vld [vmem:[%s1521 + $0x18] sm:$0xff]
  %v1526 = vld [vmem:[%s1521 + $0x20] sm:$0xff]
  %v1527 = vld [vmem:[%s1521 + $0x28] sm:$0xff]
  %v1528 = vld [vmem:[%s1521 + $0x30] sm:$0xff]
  %v1529 = vld [vmem:[%s1521 + $0x38] sm:$0xff]
  %v1530 = vld [vmem:[%s1521 + $0x40] sm:$0xff]
  %v1531 = vld [vmem:[%s1521 + $0x48] sm:$0xff]
  %v1532 = vld [vmem:[%s1521 + $0x50] sm:$0xff]
  %v1533 = vld [vmem:[%s1521 + $0x58] sm:$0xff]
  %v1534 = vld [vmem:[%s1521 + $0x60] sm:$0xff]
  %v1535 = vld [vmem:[%s1521 + $0x68] sm:$0xff]
  %v1536 = vld [vmem:[%s1521 + $0x70] sm:$0xff]
  %v1537 = vld [vmem:[%s1521 + $0x78] sm:$0xff]
  %1538 = vmatprep.subr.mxu0 0.0
  %1539 = vmatpush1.msra.mxu0 %v1522
  %1540 = vmatprep.subr.mxu0 0.0
  %1541 = vmatpush1.msra.mxu0 %v1523
  %1542 = vmatprep.subr.mxu0 0.0
  %1543 = vmatpush1.msra.mxu0 %v1524
  %1544 = vmatprep.subr.mxu0 0.0
  %1545 = vmatpush1.msra.mxu0 %v1525
  %1546 = vmatprep.subr.mxu0 0.0
  %1547 = vmatpush1.msra.mxu0 %v1526
  %1548 = vmatprep.subr.mxu0 0.0
  %1549 = vmatpush1.msra.mxu0 %v1527
  %1550 = vmatprep.subr.mxu0 0.0
  %1551 = vmatpush1.msra.mxu0 %v1528
  %1552 = vmatprep.subr.mxu0 0.0
  %1553 = vmatpush1.msra.mxu0 %v1529
  %1554 = vmatprep.subr.mxu0 0.0
  %1555 = vmatpush1.msra.mxu0 %v1530
  %1556 = vmatprep.subr.mxu0 0.0
  %1557 = vmatpush1.msra.mxu0 %v1531
  %1558 = vmatprep.subr.mxu0 0.0
  %1559 = vmatpush1.msra.mxu0 %v1532
  %1560 = vmatprep.subr.mxu0 0.0
  %1561 = vmatpush1.msra.mxu0 %v1533
  %1562 = vmatprep.subr.mxu0 0.0
  %1563 = vmatpush1.msra.mxu0 %v1534
  %1564 = vmatprep.subr.mxu0 0.0
  %1565 = vmatpush1.msra.mxu0 %v1535
  %1566 = vmatprep.subr.mxu0 0.0
  %1567 = vmatpush1.msra.mxu0 %v1536
  %1568 = vmatprep.subr.mxu0 0.0
  %1569 = vmatpush1.msra.mxu0 %v1537
  %1570 = vmatprep.subr.mxu0 0.0
  %1571 = vmatpush1.msra.mxu0 0.0
  %1572 = vmatprep.subr.mxu0 0.0
  %1573 = vmatpush1.msra.mxu0 0.0
  %1574 = vmatprep.subr.mxu0 0.0
  %1575 = vmatpush1.msra.mxu0 0.0
  %1576 = vmatprep.subr.mxu0 0.0
  %1577 = vmatpush1.msra.mxu0 0.0
  %1578 = vmatprep.subr.mxu0 0.0
  %1579 = vmatpush1.msra.mxu0 0.0
  %1580 = vmatprep.subr.mxu0 0.0
  %1581 = vmatpush1.msra.mxu0 0.0
  %1582 = vmatprep.subr.mxu0 0.0
  %1583 = vmatpush1.msra.mxu0 0.0
  %1584 = vmatprep.subr.mxu0 0.0
  %1585 = vmatpush1.msra.mxu0 0.0
  %1586 = vmatprep.subr.mxu0 0.0
  %1587 = vmatpush1.msra.mxu0 0.0
  %1588 = vmatprep.subr.mxu0 0.0
  %1589 = vmatpush1.msra.mxu0 0.0
  %1590 = vmatprep.subr.mxu0 0.0
  %1591 = vmatpush1.msra.mxu0 0.0
  %1592 = vmatprep.subr.mxu0 0.0
  %1593 = vmatpush1.msra.mxu0 0.0
  %1594 = vmatprep.subr.mxu0 0.0
  %1595 = vmatpush1.msra.mxu0 0.0
  %1596 = vmatprep.subr.mxu0 0.0
  %1597 = vmatpush1.msra.mxu0 0.0
  %1598 = vmatprep.subr.mxu0 0.0
  %1599 = vmatpush1.msra.mxu0 0.0
  %1600 = vmatprep.subr.mxu0 0.0
  %1601 = vmatpush1.msra.mxu0 0.0
  %1602 = vmatprep.mubr.f32.mxu0 0.0
  %1603 = vmatmul.mubr.f32.gmra.mrb[0].mxu0 %v1503
  %v1604 = vpop.f32.mrb[0].mxu0
  %v1605 = vadd.f32 0.0, %v1604
  %v1606 = vpop.f32.mrb[0].mxu0
  %1607 = vmatprep.mubr.f32.mxu0 0.0
  %1608 = vmatmul.mubr.f32.gmra.mrb[0].mxu0 %v1508
  %v1609 = vpop.f32.mrb[0].mxu0
  %v1610 = vadd.f32 0.0, %v1609
  %v1611 = vpop.f32.mrb[0].mxu0
  %1612 = vmatprep.mubr.f32.mxu0 0.0
  %1613 = vmatmul.mubr.f32.gmra.mrb[0].mxu0 %v1513
  %v1614 = vpop.f32.mrb[0].mxu0
  %v1615 = vadd.f32 0.0, %v1614
  %v1616 = vpop.f32.mrb[0].mxu0
  %1617 = vmatprep.mubr.f32.mxu0 0.0
  %1618 = vmatmul.mubr.f32.gmra.mrb[0].mxu0 %v1518
  %v1619 = vpop.f32.mrb[0].mxu0
  %v1620 = vadd.f32 0.0, %v1619
  %v1621 = vpop.f32.mrb[0].mxu0
  %1622 = vdwg.mxu0
  %v1623 = vadd.f32 %v1427, %v1605
  %v1624 = vadd.f32 %v1428, %v1610
  %v1625 = vadd.f32 %v1429, %v1615
  %v1626 = vadd.f32 %v1430, %v1620
  %s1627 = scalar_lea.vmem %s3, 224
  %v1628 = vld [vmem:[%s1627] sm:$0xff]
  %v1629 = vld [vmem:[%s1627 + $0x8] sm:$0xff]
  %v1630 = vld [vmem:[%s1627 + $0x10] sm:$0xff]
  %v1631 = vld [vmem:[%s1627 + $0x18] sm:$0xff]
  %1632 = vmatprep.subr.mxu0 0.0
  %1633 = vmatpush1.msra.mxu0 %v249
  %1634 = vmatprep.subr.mxu0 0.0
  %1635 = vmatpush1.msra.mxu0 %v250
  %1636 = vmatprep.subr.mxu0 0.0
  %1637 = vmatpush1.msra.mxu0 %v251
  %1638 = vmatprep.subr.mxu0 0.0
  %1639 = vmatpush1.msra.mxu0 %v252
  %1640 = vmatprep.subr.mxu0 0.0
  %1641 = vmatpush1.msra.mxu0 %v253
  %1642 = vmatprep.subr.mxu0 0.0
  %1643 = vmatpush1.msra.mxu0 %v254
  %1644 = vmatprep.subr.mxu0 0.0
  %1645 = vmatpush1.msra.mxu0 %v255
  %1646 = vmatprep.subr.mxu0 0.0
  %1647 = vmatpush1.msra.mxu0 %v256
  %1648 = vmatprep.subr.mxu0 0.0
  %1649 = vmatpush1.msra.mxu0 %v257
  %1650 = vmatprep.subr.mxu0 0.0
  %1651 = vmatpush1.msra.mxu0 %v258
  %1652 = vmatprep.subr.mxu0 0.0
  %1653 = vmatpush1.msra.mxu0 %v259
  %1654 = vmatprep.subr.mxu0 0.0
  %1655 = vmatpush1.msra.mxu0 %v260
  %1656 = vmatprep.subr.mxu0 0.0
  %1657 = vmatpush1.msra.mxu0 %v261
  %1658 = vmatprep.subr.mxu0 0.0
  %1659 = vmatpush1.msra.mxu0 %v262
  %1660 = vmatprep.subr.mxu0 0.0
  %1661 = vmatpush1.msra.mxu0 %v263
  %1662 = vmatprep.subr.mxu0 0.0
  %1663 = vmatpush1.msra.mxu0 %v264
  %1664 = vmatprep.subr.mxu0 0.0
  %1665 = vmatpush1.msra.mxu0 0.0
  %1666 = vmatprep.subr.mxu0 0.0
  %1667 = vmatpush1.msra.mxu0 0.0
  %1668 = vmatprep.subr.mxu0 0.0
  %1669 = vmatpush1.msra.mxu0 0.0
  %1670 = vmatprep.subr.mxu0 0.0
  %1671 = vmatpush1.msra.mxu0 0.0
  %1672 = vmatprep.subr.mxu0 0.0
  %1673 = vmatpush1.msra.mxu0 0.0
  %1674 = vmatprep.subr.mxu0 0.0
  %1675 = vmatpush1.msra.mxu0 0.0
  %1676 = vmatprep.subr.mxu0 0.0
  %1677 = vmatpush1.msra.mxu0 0.0
  %1678 = vmatprep.subr.mxu0 0.0
  %1679 = vmatpush1.msra.mxu0 0.0
  %1680 = vmatprep.subr.mxu0 0.0
  %1681 = vmatpush1.msra.mxu0 0.0
  %1682 = vmatprep.subr.mxu0 0.0
  %1683 = vmatpush1.msra.mxu0 0.0
  %1684 = vmatprep.subr.mxu0 0.0
  %1685 = vmatpush1.msra.mxu0 0.0
  %1686 = vmatprep.subr.mxu0 0.0
  %1687 = vmatpush1.msra.mxu0 0.0
  %1688 = vmatprep.subr.mxu0 0.0
  %1689 = vmatpush1.msra.mxu0 0.0
  %1690 = vmatprep.subr.mxu0 0.0
  %1691 = vmatpush1.msra.mxu0 0.0
  %1692 = vmatprep.subr.mxu0 0.0
  %1693 = vmatpush1.msra.mxu0 0.0
  %1694 = vmatprep.subr.mxu0 0.0
  %1695 = vmatpush1.msra.mxu0 0.0
  %1696 = vmatprep.mubr.f32.mxu0 0.0
  %1697 = vmatmul.mubr.f32.gmra.mrb[0].mxu0 %v1628
  %v1698 = vpop.f32.mrb[0].mxu0
  %v1699 = vadd.f32 0.0, %v1698
  %v1700 = vpop.f32.mrb[0].mxu0
  %1701 = vmatprep.mubr.f32.mxu0 0.0
  %1702 = vmatmul.mubr.f32.gmra.mrb[0].mxu0 %v1629
  %v1703 = vpop.f32.mrb[0].mxu0
  %v1704 = vadd.f32 0.0, %v1703
  %v1705 = vpop.f32.mrb[0].mxu0
  %1706 = vmatprep.mubr.f32.mxu0 0.0
  %1707 = vmatmul.mubr.f32.gmra.mrb[0].mxu0 %v1630
  %v1708 = vpop.f32.mrb[0].mxu0
  %v1709 = vadd.f32 0.0, %v1708
  %v1710 = vpop.f32.mrb[0].mxu0
  %1711 = vmatprep.mubr.f32.mxu0 0.0
  %1712 = vmatmul.mubr.f32.gmra.mrb[0].mxu0 %v1631
  %v1713 = vpop.f32.mrb[0].mxu0
  %v1714 = vadd.f32 0.0, %v1713
  %v1715 = vpop.f32.mrb[0].mxu0
  %1716 = vdwg.mxu0
  %s1717 = scalar_lea.vmem %s4, 896
  %v1718 = vld [vmem:[%s1717] sm:$0xff]
  %v1719 = vld [vmem:[%s1717 + $0x8] sm:$0xff]
  %v1720 = vld [vmem:[%s1717 + $0x10] sm:$0xff]
  %v1721 = vld [vmem:[%s1717 + $0x18] sm:$0xff]
  %v1722 = vld [vmem:[%s1717 + $0x20] sm:$0xff]
  %v1723 = vld [vmem:[%s1717 + $0x28] sm:$0xff]
  %v1724 = vld [vmem:[%s1717 + $0x30] sm:$0xff]
  %v1725 = vld [vmem:[%s1717 + $0x38] sm:$0xff]
  %v1726 = vld [vmem:[%s1717 + $0x40] sm:$0xff]
  %v1727 = vld [vmem:[%s1717 + $0x48] sm:$0xff]
  %v1728 = vld [vmem:[%s1717 + $0x50] sm:$0xff]
  %v1729 = vld [vmem:[%s1717 + $0x58] sm:$0xff]
  %v1730 = vld [vmem:[%s1717 + $0x60] sm:$0xff]
  %v1731 = vld [vmem:[%s1717 + $0x68] sm:$0xff]
  %v1732 = vld [vmem:[%s1717 + $0x70] sm:$0xff]
  %v1733 = vld [vmem:[%s1717 + $0x78] sm:$0xff]
  %1734 = vmatprep.subr.mxu0 0.0
  %1735 = vmatpush1.msra.mxu0 %v1718
  %1736 = vmatprep.subr.mxu0 0.0
  %1737 = vmatpush1.msra.mxu0 %v1719
  %1738 = vmatprep.subr.mxu0 0.0
  %1739 = vmatpush1.msra.mxu0 %v1720
  %1740 = vmatprep.subr.mxu0 0.0
  %1741 = vmatpush1.msra.mxu0 %v1721
  %1742 = vmatprep.subr.mxu0 0.0
  %1743 = vmatpush1.msra.mxu0 %v1722
  %1744 = vmatprep.subr.mxu0 0.0
  %1745 = vmatpush1.msra.mxu0 %v1723
  %1746 = vmatprep.subr.mxu0 0.0
  %1747 = vmatpush1.msra.mxu0 %v1724
  %1748 = vmatprep.subr.mxu0 0.0
  %1749 = vmatpush1.msra.mxu0 %v1725
  %1750 = vmatprep.subr.mxu0 0.0
  %1751 = vmatpush1.msra.mxu0 %v1726
  %1752 = vmatprep.subr.mxu0 0.0
  %1753 = vmatpush1.msra.mxu0 %v1727
  %1754 = vmatprep.subr.mxu0 0.0
  %1755 = vmatpush1.msra.mxu0 %v1728
  %1756 = vmatprep.subr.mxu0 0.0
  %1757 = vmatpush1.msra.mxu0 %v1729
  %1758 = vmatprep.subr.mxu0 0.0
  %1759 = vmatpush1.msra.mxu0 %v1730
  %1760 = vmatprep.subr.mxu0 0.0
  %1761 = vmatpush1.msra.mxu0 %v1731
  %1762 = vmatprep.subr.mxu0 0.0
  %1763 = vmatpush1.msra.mxu0 %v1732
  %1764 = vmatprep.subr.mxu0 0.0
  %1765 = vmatpush1.msra.mxu0 %v1733
  %1766 = vmatprep.subr.mxu0 0.0
  %1767 = vmatpush1.msra.mxu0 0.0
  %1768 = vmatprep.subr.mxu0 0.0
  %1769 = vmatpush1.msra.mxu0 0.0
  %1770 = vmatprep.subr.mxu0 0.0
  %1771 = vmatpush1.msra.mxu0 0.0
  %1772 = vmatprep.subr.mxu0 0.0
  %1773 = vmatpush1.msra.mxu0 0.0
  %1774 = vmatprep.subr.mxu0 0.0
  %1775 = vmatpush1.msra.mxu0 0.0
  %1776 = vmatprep.subr.mxu0 0.0
  %1777 = vmatpush1.msra.mxu0 0.0
  %1778 = vmatprep.subr.mxu0 0.0
  %1779 = vmatpush1.msra.mxu0 0.0
  %1780 = vmatprep.subr.mxu0 0.0
  %1781 = vmatpush1.msra.mxu0 0.0
  %1782 = vmatprep.subr.mxu0 0.0
  %1783 = vmatpush1.msra.mxu0 0.0
  %1784 = vmatprep.subr.mxu0 0.0
  %1785 = vmatpush1.msra.mxu0 0.0
  %1786 = vmatprep.subr.mxu0 0.0
  %1787 = vmatpush1.msra.mxu0 0.0
  %1788 = vmatprep.subr.mxu0 0.0
  %1789 = vmatpush1.msra.mxu0 0.0
  %1790 = vmatprep.subr.mxu0 0.0
  %1791 = vmatpush1.msra.mxu0 0.0
  %1792 = vmatprep.subr.mxu0 0.0
  %1793 = vmatpush1.msra.mxu0 0.0
  %1794 = vmatprep.subr.mxu0 0.0
  %1795 = vmatpush1.msra.mxu0 0.0
  %1796 = vmatprep.subr.mxu0 0.0
  %1797 = vmatpush1.msra.mxu0 0.0
  %1798 = vmatprep.mubr.f32.mxu0 0.0
  %1799 = vmatmul.mubr.f32.gmra.mrb[0].mxu0 %v1699
  %v1800 = vpop.f32.mrb[0].mxu0
  %v1801 = vadd.f32 0.0, %v1800
  %v1802 = vpop.f32.mrb[0].mxu0
  %1803 = vmatprep.mubr.f32.mxu0 0.0
  %1804 = vmatmul.mubr.f32.gmra.mrb[0].mxu0 %v1704
  %v1805 = vpop.f32.mrb[0].mxu0
  %v1806 = vadd.f32 0.0, %v1805
  %v1807 = vpop.f32.mrb[0].mxu0
  %1808 = vmatprep.mubr.f32.mxu0 0.0
  %1809 = vmatmul.mubr.f32.gmra.mrb[0].mxu0 %v1709
  %v1810 = vpop.f32.mrb[0].mxu0
  %v1811 = vadd.f32 0.0, %v1810
  %v1812 = vpop.f32.mrb[0].mxu0
  %1813 = vmatprep.mubr.f32.mxu0 0.0
  %1814 = vmatmul.mubr.f32.gmra.mrb[0].mxu0 %v1714
  %v1815 = vpop.f32.mrb[0].mxu0
  %v1816 = vadd.f32 0.0, %v1815
  %v1817 = vpop.f32.mrb[0].mxu0
  %1818 = vdwg.mxu0
  %v1819 = vadd.f32 %v1623, %v1801
  %v1820 = vadd.f32 %v1624, %v1806
  %v1821 = vadd.f32 %v1625, %v1811
  %v1822 = vadd.f32 %v1626, %v1816
  %s1823 = scalar_lea.vmem %s3, 256
  %v1824 = vld [vmem:[%s1823] sm:$0xff]
  %v1825 = vld [vmem:[%s1823 + $0x8] sm:$0xff]
  %v1826 = vld [vmem:[%s1823 + $0x10] sm:$0xff]
  %v1827 = vld [vmem:[%s1823 + $0x18] sm:$0xff]
  %1828 = vmatprep.subr.mxu0 0.0
  %1829 = vmatpush1.msra.mxu0 %v249
  %1830 = vmatprep.subr.mxu0 0.0
  %1831 = vmatpush1.msra.mxu0 %v250
  %1832 = vmatprep.subr.mxu0 0.0
  %1833 = vmatpush1.msra.mxu0 %v251
  %1834 = vmatprep.subr.mxu0 0.0
  %1835 = vmatpush1.msra.mxu0 %v252
  %1836 = vmatprep.subr.mxu0 0.0
  %1837 = vmatpush1.msra.mxu0 %v253
  %1838 = vmatprep.subr.mxu0 0.0
  %1839 = vmatpush1.msra.mxu0 %v254
  %1840 = vmatprep.subr.mxu0 0.0
  %1841 = vmatpush1.msra.mxu0 %v255
  %1842 = vmatprep.subr.mxu0 0.0
  %1843 = vmatpush1.msra.mxu0 %v256
  %1844 = vmatprep.subr.mxu0 0.0
  %1845 = vmatpush1.msra.mxu0 %v257
  %1846 = vmatprep.subr.mxu0 0.0
  %1847 = vmatpush1.msra.mxu0 %v258
  %1848 = vmatprep.subr.mxu0 0.0
  %1849 = vmatpush1.msra.mxu0 %v259
  %1850 = vmatprep.subr.mxu0 0.0
  %1851 = vmatpush1.msra.mxu0 %v260
  %1852 = vmatprep.subr.mxu0 0.0
  %1853 = vmatpush1.msra.mxu0 %v261
  %1854 = vmatprep.subr.mxu0 0.0
  %1855 = vmatpush1.msra.mxu0 %v262
  %1856 = vmatprep.subr.mxu0 0.0
  %1857 = vmatpush1.msra.mxu0 %v263
  %1858 = vmatprep.subr.mxu0 0.0
  %1859 = vmatpush1.msra.mxu0 %v264
  %1860 = vmatprep.subr.mxu0 0.0
  %1861 = vmatpush1.msra.mxu0 0.0
  %1862 = vmatprep.subr.mxu0 0.0
  %1863 = vmatpush1.msra.mxu0 0.0
  %1864 = vmatprep.subr.mxu0 0.0
  %1865 = vmatpush1.msra.mxu0 0.0
  %1866 = vmatprep.subr.mxu0 0.0
  %1867 = vmatpush1.msra.mxu0 0.0
  %1868 = vmatprep.subr.mxu0 0.0
  %1869 = vmatpush1.msra.mxu0 0.0
  %1870 = vmatprep.subr.mxu0 0.0
  %1871 = vmatpush1.msra.mxu0 0.0
  %1872 = vmatprep.subr.mxu0 0.0
  %1873 = vmatpush1.msra.mxu0 0.0
  %1874 = vmatprep.subr.mxu0 0.0
  %1875 = vmatpush1.msra.mxu0 0.0
  %1876 = vmatprep.subr.mxu0 0.0
  %1877 = vmatpush1.msra.mxu0 0.0
  %1878 = vmatprep.subr.mxu0 0.0
  %1879 = vmatpush1.msra.mxu0 0.0
  %1880 = vmatprep.subr.mxu0 0.0
  %1881 = vmatpush1.msra.mxu0 0.0
  %1882 = vmatprep.subr.mxu0 0.0
  %1883 = vmatpush1.msra.mxu0 0.0
  %1884 = vmatprep.subr.mxu0 0.0
  %1885 = vmatpush1.msra.mxu0 0.0
  %1886 = vmatprep.subr.mxu0 0.0
  %1887 = vmatpush1.msra.mxu0 0.0
  %1888 = vmatprep.subr.mxu0 0.0
  %1889 = vmatpush1.msra.mxu0 0.0
  %1890 = vmatprep.subr.mxu0 0.0
  %1891 = vmatpush1.msra.mxu0 0.0
  %1892 = vmatprep.mubr.f32.mxu0 0.0
  %1893 = vmatmul.mubr.f32.gmra.mrb[0].mxu0 %v1824
  %v1894 = vpop.f32.mrb[0].mxu0
  %v1895 = vadd.f32 0.0, %v1894
  %v1896 = vpop.f32.mrb[0].mxu0
  %1897 = vmatprep.mubr.f32.mxu0 0.0
  %1898 = vmatmul.mubr.f32.gmra.mrb[0].mxu0 %v1825
  %v1899 = vpop.f32.mrb[0].mxu0
  %v1900 = vadd.f32 0.0, %v1899
  %v1901 = vpop.f32.mrb[0].mxu0
  %1902 = vmatprep.mubr.f32.mxu0 0.0
  %1903 = vmatmul.mubr.f32.gmra.mrb[0].mxu0 %v1826
  %v1904 = vpop.f32.mrb[0].mxu0
  %v1905 = vadd.f32 0.0, %v1904
  %v1906 = vpop.f32.mrb[0].mxu0
  %1907 = vmatprep.mubr.f32.mxu0 0.0
  %1908 = vmatmul.mubr.f32.gmra.mrb[0].mxu0 %v1827
  %v1909 = vpop.f32.mrb[0].mxu0
  %v1910 = vadd.f32 0.0, %v1909
  %v1911 = vpop.f32.mrb[0].mxu0
  %1912 = vdwg.mxu0
  %s1913 = scalar_lea.vmem %s4, 1024
  %v1914 = vld [vmem:[%s1913] sm:$0xff]
  %v1915 = vld [vmem:[%s1913 + $0x8] sm:$0xff]
  %v1916 = vld [vmem:[%s1913 + $0x10] sm:$0xff]
  %v1917 = vld [vmem:[%s1913 + $0x18] sm:$0xff]
  %v1918 = vld [vmem:[%s1913 + $0x20] sm:$0xff]
  %v1919 = vld [vmem:[%s1913 + $0x28] sm:$0xff]
  %v1920 = vld [vmem:[%s1913 + $0x30] sm:$0xff]
  %v1921 = vld [vmem:[%s1913 + $0x38] sm:$0xff]
  %v1922 = vld [vmem:[%s1913 + $0x40] sm:$0xff]
  %v1923 = vld [vmem:[%s1913 + $0x48] sm:$0xff]
  %v1924 = vld [vmem:[%s1913 + $0x50] sm:$0xff]
  %v1925 = vld [vmem:[%s1913 + $0x58] sm:$0xff]
  %v1926 = vld [vmem:[%s1913 + $0x60] sm:$0xff]
  %v1927 = vld [vmem:[%s1913 + $0x68] sm:$0xff]
  %v1928 = vld [vmem:[%s1913 + $0x70] sm:$0xff]
  %v1929 = vld [vmem:[%s1913 + $0x78] sm:$0xff]
  %1930 = vmatprep.subr.mxu0 0.0
  %1931 = vmatpush1.msra.mxu0 %v1914
  %1932 = vmatprep.subr.mxu0 0.0
  %1933 = vmatpush1.msra.mxu0 %v1915
  %1934 = vmatprep.subr.mxu0 0.0
  %1935 = vmatpush1.msra.mxu0 %v1916
  %1936 = vmatprep.subr.mxu0 0.0
  %1937 = vmatpush1.msra.mxu0 %v1917
  %1938 = vmatprep.subr.mxu0 0.0
  %1939 = vmatpush1.msra.mxu0 %v1918
  %1940 = vmatprep.subr.mxu0 0.0
  %1941 = vmatpush1.msra.mxu0 %v1919
  %1942 = vmatprep.subr.mxu0 0.0
  %1943 = vmatpush1.msra.mxu0 %v1920
  %1944 = vmatprep.subr.mxu0 0.0
  %1945 = vmatpush1.msra.mxu0 %v1921
  %1946 = vmatprep.subr.mxu0 0.0
  %1947 = vmatpush1.msra.mxu0 %v1922
  %1948 = vmatprep.subr.mxu0 0.0
  %1949 = vmatpush1.msra.mxu0 %v1923
  %1950 = vmatprep.subr.mxu0 0.0
  %1951 = vmatpush1.msra.mxu0 %v1924
  %1952 = vmatprep.subr.mxu0 0.0
  %1953 = vmatpush1.msra.mxu0 %v1925
  %1954 = vmatprep.subr.mxu0 0.0
  %1955 = vmatpush1.msra.mxu0 %v1926
  %1956 = vmatprep.subr.mxu0 0.0
  %1957 = vmatpush1.msra.mxu0 %v1927
  %1958 = vmatprep.subr.mxu0 0.0
  %1959 = vmatpush1.msra.mxu0 %v1928
  %1960 = vmatprep.subr.mxu0 0.0
  %1961 = vmatpush1.msra.mxu0 %v1929
  %1962 = vmatprep.subr.mxu0 0.0
  %1963 = vmatpush1.msra.mxu0 0.0
  %1964 = vmatprep.subr.mxu0 0.0
  %1965 = vmatpush1.msra.mxu0 0.0
  %1966 = vmatprep.subr.mxu0 0.0
  %1967 = vmatpush1.msra.mxu0 0.0
  %1968 = vmatprep.subr.mxu0 0.0
  %1969 = vmatpush1.msra.mxu0 0.0
  %1970 = vmatprep.subr.mxu0 0.0
  %1971 = vmatpush1.msra.mxu0 0.0
  %1972 = vmatprep.subr.mxu0 0.0
  %1973 = vmatpush1.msra.mxu0 0.0
  %1974 = vmatprep.subr.mxu0 0.0
  %1975 = vmatpush1.msra.mxu0 0.0
  %1976 = vmatprep.subr.mxu0 0.0
  %1977 = vmatpush1.msra.mxu0 0.0
  %1978 = vmatprep.subr.mxu0 0.0
  %1979 = vmatpush1.msra.mxu0 0.0
  %1980 = vmatprep.subr.mxu0 0.0
  %1981 = vmatpush1.msra.mxu0 0.0
  %1982 = vmatprep.subr.mxu0 0.0
  %1983 = vmatpush1.msra.mxu0 0.0
  %1984 = vmatprep.subr.mxu0 0.0
  %1985 = vmatpush1.msra.mxu0 0.0
  %1986 = vmatprep.subr.mxu0 0.0
  %1987 = vmatpush1.msra.mxu0 0.0
  %1988 = vmatprep.subr.mxu0 0.0
  %1989 = vmatpush1.msra.mxu0 0.0
  %1990 = vmatprep.subr.mxu0 0.0
  %1991 = vmatpush1.msra.mxu0 0.0
  %1992 = vmatprep.subr.mxu0 0.0
  %1993 = vmatpush1.msra.mxu0 0.0
  %1994 = vmatprep.mubr.f32.mxu0 0.0
  %1995 = vmatmul.mubr.f32.gmra.mrb[0].mxu0 %v1895
  %v1996 = vpop.f32.mrb[0].mxu0
  %v1997 = vadd.f32 0.0, %v1996
  %v1998 = vpop.f32.mrb[0].mxu0
  %1999 = vmatprep.mubr.f32.mxu0 0.0
  %2000 = vmatmul.mubr.f32.gmra.mrb[0].mxu0 %v1900
  %v2001 = vpop.f32.mrb[0].mxu0
  %v2002 = vadd.f32 0.0, %v2001
  %v2003 = vpop.f32.mrb[0].mxu0
  %2004 = vmatprep.mubr.f32.mxu0 0.0
  %2005 = vmatmul.mubr.f32.gmra.mrb[0].mxu0 %v1905
  %v2006 = vpop.f32.mrb[0].mxu0
  %v2007 = vadd.f32 0.0, %v2006
  %v2008 = vpop.f32.mrb[0].mxu0
  %2009 = vmatprep.mubr.f32.mxu0 0.0
  %2010 = vmatmul.mubr.f32.gmra.mrb[0].mxu0 %v1910
  %v2011 = vpop.f32.mrb[0].mxu0
  %v2012 = vadd.f32 0.0, %v2011
  %v2013 = vpop.f32.mrb[0].mxu0
  %2014 = vdwg.mxu0
  %v2015 = vadd.f32 %v1819, %v1997
  %v2016 = vadd.f32 %v1820, %v2002
  %v2017 = vadd.f32 %v1821, %v2007
  %v2018 = vadd.f32 %v1822, %v2012
  %v2019 = vld [vmem:[%s5] sm:$0x1]
  %v2021 = vlaneseq
  %v2022 = vshrl.u32 %v2021, 7
  %v2023 = vsub.s32 0, %v2022
  %v2024 = vrot.slane %v2019, %v2023
  %v2026 = vadd.f32 %v2015, %v2024
  %v2027 = vadd.f32 %v2016, %v2024
  %v2028 = vadd.f32 %v2017, %v2024
  %v2029 = vadd.f32 %v2018, %v2024
  %vm2030 = vcmp.ge.f32.partialorder %v2026, 0.0
  %vm2031 = vcmp.ge.f32.partialorder %v2027, 0.0
  %vm2032 = vcmp.ge.f32.partialorder %v2028, 0.0
  %vm2033 = vcmp.ge.f32.partialorder %v2029, 0.0
  %v2034 = vmul.f32 %v2026, 0.2
  %v2035 = vmul.f32 %v2027, 0.2
  %v2036 = vmul.f32 %v2028, 0.2
  %v2037 = vmul.f32 %v2029, 0.2
  %v2038 = vsel %vm2030, %v2026, %v2034
  %v2039 = vsel %vm2031, %v2027, %v2035
  %v2040 = vsel %vm2032, %v2028, %v2036
  %v2041 = vsel %vm2033, %v2029, %v2037
  %v2042 = vld [vmem:[%s6] sm:$0xff]
  %v2043 = vld [vmem:[%s6 + $0x8] sm:$0xff]
  %v2044 = vld [vmem:[%s6 + $0x10] sm:$0xff]
  %v2045 = vld [vmem:[%s6 + $0x18] sm:$0xff]
  %v2046 = vmul.f32 %v2038, %v2042
  %v2047 = vmul.f32 %v2039, %v2043
  %v2048 = vmul.f32 %v2040, %v2044
  %v2049 = vmul.f32 %v2041, %v2045
  %v2050 = vld [vmem:[%s7] sm:$0x3]
  %vm2051 = vcmask 261120
  %v2053 = vsel %vm2051, %v2050, 0
  %2055 = vmatprep.subr.mxu0 0.0
  %2056 = vmatpush1.msra.mxu0 %v2046
  %2057 = vmatprep.subr.mxu0 0.0
  %2058 = vmatpush1.msra.mxu0 %v2047
  %2059 = vmatprep.subr.mxu0 0.0
  %2060 = vmatpush1.msra.mxu0 %v2048
  %2061 = vmatprep.subr.mxu0 0.0
  %2062 = vmatpush1.msra.mxu0 %v2049
  %2063 = vmatprep.subr.mxu0 0.0
  %2064 = vmatpush1.msra.mxu0 0.0
  %2065 = vmatprep.subr.mxu0 0.0
  %2066 = vmatpush1.msra.mxu0 0.0
  %2067 = vmatprep.subr.mxu0 0.0
  %2068 = vmatpush1.msra.mxu0 0.0
  %2069 = vmatprep.subr.mxu0 0.0
  %2070 = vmatpush1.msra.mxu0 0.0
  %2071 = vmatprep.subr.mxu0 0.0
  %2072 = vmatpush1.msra.mxu0 0.0
  %2073 = vmatprep.subr.mxu0 0.0
  %2074 = vmatpush1.msra.mxu0 0.0
  %2075 = vmatprep.subr.mxu0 0.0
  %2076 = vmatpush1.msra.mxu0 0.0
  %2077 = vmatprep.subr.mxu0 0.0
  %2078 = vmatpush1.msra.mxu0 0.0
  %2079 = vmatprep.subr.mxu0 0.0
  %2080 = vmatpush1.msra.mxu0 0.0
  %2081 = vmatprep.subr.mxu0 0.0
  %2082 = vmatpush1.msra.mxu0 0.0
  %2083 = vmatprep.subr.mxu0 0.0
  %2084 = vmatpush1.msra.mxu0 0.0
  %2085 = vmatprep.subr.mxu0 0.0
  %2086 = vmatpush1.msra.mxu0 0.0
  %2087 = vmatprep.subr.mxu0 0.0
  %2088 = vmatpush1.msra.mxu0 0.0
  %2089 = vmatprep.subr.mxu0 0.0
  %2090 = vmatpush1.msra.mxu0 0.0
  %2091 = vmatprep.subr.mxu0 0.0
  %2092 = vmatpush1.msra.mxu0 0.0
  %2093 = vmatprep.subr.mxu0 0.0
  %2094 = vmatpush1.msra.mxu0 0.0
  %2095 = vmatprep.subr.mxu0 0.0
  %2096 = vmatpush1.msra.mxu0 0.0
  %2097 = vmatprep.subr.mxu0 0.0
  %2098 = vmatpush1.msra.mxu0 0.0
  %2099 = vmatprep.subr.mxu0 0.0
  %2100 = vmatpush1.msra.mxu0 0.0
  %2101 = vmatprep.subr.mxu0 0.0
  %2102 = vmatpush1.msra.mxu0 0.0
  %2103 = vmatprep.subr.mxu0 0.0
  %2104 = vmatpush1.msra.mxu0 0.0
  %2105 = vmatprep.subr.mxu0 0.0
  %2106 = vmatpush1.msra.mxu0 0.0
  %2107 = vmatprep.subr.mxu0 0.0
  %2108 = vmatpush1.msra.mxu0 0.0
  %2109 = vmatprep.subr.mxu0 0.0
  %2110 = vmatpush1.msra.mxu0 0.0
  %2111 = vmatprep.subr.mxu0 0.0
  %2112 = vmatpush1.msra.mxu0 0.0
  %2113 = vmatprep.subr.mxu0 0.0
  %2114 = vmatpush1.msra.mxu0 0.0
  %2115 = vmatprep.subr.mxu0 0.0
  %2116 = vmatpush1.msra.mxu0 0.0
  %2117 = vmatprep.subr.mxu0 0.0
  %2118 = vmatpush1.msra.mxu0 0.0
  %2119 = vmatprep.mubr.f32.mxu0 0.0
  %2120 = vmatmul.mubr.f32.gmra.mrb[0].mxu0 %v2053
  %v2121 = vpop.f32.mrb[0].mxu0
  %v2122 = vadd.f32 0.0, %v2121
  %v2123 = vpop.f32.mrb[0].mxu0
  %2124 = vdwg.mxu0
  %vm2125 = vcmask 1041408
  %v2126 = vsel %vm2125, %v2122, 0.0
  %2127 = vadd.xlane.f32.xlu0 %v2126
  %v2128 = vpop.xlane.xlu0 %2127
  %s2129 = sld [smem:[#allocation2]]
  %v2130 = vstv %s2129
  %v2131 = vadd.f32 %v2128, %v2130
  %2132 = vst [vmem:[%s9] sm:$0x3] %v2131
  // Predicated region
  $region38: #{discriminator_m.1} parent=0 // pred_check
    _
  $region39: #{discriminator_m.1} parent=0 // pred_check_branch
    %2134 = sbr.rel (0) target = $region41
  $region40: #{discriminator_m.1} parent=0 // pred_region
    _
  $region41: #{discriminator_m.1} parent=0 // pred_fallthru
    _
  // Predicated region
  $region42: #{discriminator_m.1} parent=0 // pred_check
    _
  $region43: #{discriminator_m.1} parent=0 // pred_check_branch
    %2136 = sbr.rel (0) target = $region45
  $region44: #{discriminator_m.1} parent=0 // pred_region
    _
  $region45: #{discriminator_m.1} parent=0 // pred_fallthru
    _

</llo_original>
